<compile_context>
chip_gen: v6e
topology: v6e:2x2x1
jax: 0.10.0
libtpu: 0.0.40
codegen_flags: <defaults>
</compile_context>

<pallas_src>
import functools

import jax
import jax.numpy as jnp
from jax.experimental import pallas as pl
from jax.experimental.pallas import tpu as pltpu


def _remove_color_kernel(a_ref, b_ref, out_ref, halo_ref, *, r,
                         padding_val, distance_metric):
    """One grid step = one (batch, row-tile); emits all K*K shift planes."""
    K = 2 * r + 1
    _, C, th, Wp = a_ref.shape
    W = out_ref.shape[-1]
    pad = jnp.float32(padding_val)

    # Assemble the contiguous (th + HB)-row halo slab once per grid step:
    # rows [0, th) from the aligned tile stream, rows [th, th + HB) from the
    # tiny next-block halo stream. Every row window below is a slice of it.
    for c in range(C):
        halo_ref[c, :th, :] = a_ref[0, c]
        halo_ref[c, th:, :] = b_ref[0, c]

    for dy in range(K):                      # static: window rows [dy, dy+th)
        for dx in range(K):                  # static: lane shift via XLU roll
            shift = (r - dx) % Wp
            d = None
            for c in range(C):
                center = halo_ref[c, r:r + th, :]
                win = halo_ref[c, dy:dy + th, :]
                if shift:
                    # Wrap-around lands in padding_val columns -> emulates
                    # Pad(fill=padding_val) on the left/right image borders.
                    win = pltpu.roll(win, shift=shift, axis=1)
                diff = center - win
                if distance_metric == 'absolute':
                    term = jnp.abs(diff)
                elif distance_metric == 'euclidean':
                    term = diff * diff
                else:
                    raise ValueError(distance_metric)
                d = term if d is None else d + term
            if distance_metric == 'euclidean':
                d = jnp.sqrt(d)
            # torch: gradient_image[gradient_image.isnan()] = padding_val
            d = jnp.where(jnp.isnan(d), pad, d)
            out_ref[0, dy * K + dx] = d[:, :W]


def remove_color(image, receptive_field=1, distance_metric='absolute',
                 padding_val=jnp.inf, *, max_tile_rows=None,
                 vmem_block_budget_bytes=26 << 20):
    if distance_metric not in ('absolute', 'euclidean'):
        raise ValueError(f'unknown distance_metric: {distance_metric}')
    B, C, H, W = image.shape
    r = int(receptive_field)
    K = 2 * r + 1
    L = K * K
    img = image.astype(jnp.float32)

    # Halo rows appended below each row tile (multiple of 8, >= 2r).
    HB = max(8, ((2 * r + 7) // 8) * 8)
    # Lane-dense padded width with >= r trailing padding_val columns so the
    # pltpu.roll wrap-around reads Pad(fill=padding_val) values.
    Wp = ((W + r + 127) // 128) * 128
    # Rows rounded up so every tile is HB-aligned (only matters if H % 8 != 0).
    Hq = ((H + HB - 1) // HB) * HB

    # Tile height: largest divisor of Hq that is a multiple of HB and keeps
    # the double-buffered blocks + halo scratch + in-kernel temps in budget.
    per_row = 4 * (3 * C * Wp + 2 * L * W + 8 * Wp)
    fixed = 4 * (3 * C * HB * Wp)
    cap = max(HB, (vmem_block_budget_bytes - fixed) // per_row)
    if max_tile_rows is not None:
        cap = min(cap, int(max_tile_rows))
    cap = min(int(cap), Hq)
    th = HB
    for cand in range(HB, cap + 1, HB):
        if Hq % cand == 0:
            th = cand
    T = Hq // th

    pv = jnp.float32(padding_val)
    # (B, C, Hq + HB, Wp): rows [0, r) pad, [r, r + H) image, rest pad;
    # cols [0, W) image, [W, Wp) pad.
    padded = jnp.pad(
        img, ((0, 0), (0, 0), (r, (Hq - H) + (HB - r)), (0, Wp - W)),
        constant_values=pv)

    # Explicit VMEM budget: double-buffered in/out blocks + halo scratch +
    # headroom for in-kernel temporaries.
    blk_bytes = 4 * (2 * C * th * Wp + 2 * C * HB * Wp + 2 * L * th * W
                     + C * (th + HB) * Wp + 8 * th * Wp)
    vmem_limit = int(min(max(blk_bytes + (4 << 20), 16 << 20), 64 << 20))

    kernel = functools.partial(
        _remove_color_kernel, r=r, padding_val=float(padding_val),
        distance_metric=distance_metric)

    out = pl.pallas_call(
        kernel,
        out_shape=jax.ShapeDtypeStruct((B, L, Hq, W), jnp.float32),
        grid=(B, T),
        in_specs=[
            # Aligned th-row tile of the padded image.
            pl.BlockSpec((1, C, th, Wp), lambda b, t: (b, 0, t, 0)),
            # Tiny HB-row halo block just below the tile (next th-block start).
            pl.BlockSpec((1, C, HB, Wp),
                         lambda b, t: (b, 0, (t + 1) * (th // HB), 0)),
        ],
        out_specs=pl.BlockSpec((1, L, th, W), lambda b, t: (b, 0, t, 0)),
        scratch_shapes=[pltpu.VMEM((C, th + HB, Wp), jnp.float32)],
        compiler_params=pltpu.CompilerParams(
            dimension_semantics=("parallel", "parallel"),
            vmem_limit_bytes=vmem_limit),
    )(padded, padded)

    if Hq != H:
        # TODO(synk): rare path (H not a multiple of 8) pays one extra HBM
        # copy of the output for this row slice.
        out = out[:, :, :H, :]
    return out


def _reference(image, receptive_field=1, distance_metric='absolute',
               padding_val=jnp.inf):
    """Plain-JAX mirror of the torch forward, for correctness checks."""
    B, C, H, W = image.shape
    r = receptive_field
    K = 2 * r + 1
    img = image.astype(jnp.float32)
    padded = jnp.pad(img, ((0, 0), (0, 0), (r, r), (r, r)),
                     constant_values=jnp.float32(padding_val))
    outs = []
    for dy in range(K):
        for dx in range(K):
            win = padded[:, :, dy:dy + H, dx:dx + W]
            diff = img - win
            if distance_metric == 'absolute':
                outs.append(jnp.sum(jnp.abs(diff), axis=1))
            else:
                outs.append(jnp.sqrt(jnp.sum(diff * diff, axis=1)))
    g = jnp.stack(outs, axis=1)
    return jnp.where(jnp.isnan(g), jnp.float32(padding_val), g)


if __name__ == "__main__":
    key = jax.random.PRNGKey(0)
    B, C, H, W = 2, 3, 16, 16   # module hard-codes 3 channels in its reshape
    image = jax.random.uniform(key, (B, C, H, W), dtype=jnp.float32)

    # r = 1, absolute (single row tile)
    out = remove_color(image, receptive_field=1,
                       distance_metric='absolute', padding_val=jnp.inf)
    out = jax.block_until_ready(out)
    ref = _reference(image, receptive_field=1, distance_metric='absolute')
    assert out.shape == (B, 9, H, W), out.shape
    assert bool(jnp.allclose(out, ref)), "absolute r=1 mismatch"

    # r = 1, absolute, forced 8-row tiles (exercises the halo stream / T > 1)
    out_t = remove_color(image, receptive_field=1, distance_metric='absolute',
                         padding_val=jnp.inf, max_tile_rows=8)
    assert bool(jnp.allclose(out_t, ref)), "tiled (T=2) mismatch"

    # r = 1, euclidean
    out_e = remove_color(image, receptive_field=1,
                         distance_metric='euclidean', padding_val=jnp.inf)
    ref_e = _reference(image, receptive_field=1, distance_metric='euclidean')
    assert bool(jnp.allclose(out_e, ref_e, atol=1e-6)), "euclidean mismatch"

    # r = 2, absolute (bigger receptive field, more shift planes)
    out2 = remove_color(image, receptive_field=2,
                        distance_metric='absolute', padding_val=jnp.inf)
    ref2 = _reference(image, receptive_field=2, distance_metric='absolute')
    assert out2.shape == (B, 25, H, W), out2.shape
    assert bool(jnp.allclose(out2, ref2)), "absolute r=2 mismatch"

    # inf pixel: exercises the inf - inf -> NaN -> padding_val path
    image_inf = image.at[0, 1, 5, 7].set(jnp.inf)
    out_i = remove_color(image_inf, receptive_field=1,
                         distance_metric='absolute', padding_val=jnp.inf)
    ref_i = _reference(image_inf, receptive_field=1,
                       distance_metric='absolute')
    assert bool(jnp.allclose(out_i, ref_i)), "inf-pixel mismatch"

    # H not a multiple of 8 (ragged bottom tile path)
    image_r = jax.random.uniform(jax.random.PRNGKey(1), (B, C, 12, W),
                                 dtype=jnp.float32)
    out_r = remove_color(image_r, receptive_field=1,
                         distance_metric='absolute', padding_val=jnp.inf)
    ref_r = _reference(image_r, receptive_field=1, distance_metric='absolute')
    assert out_r.shape == (B, 9, 12, W), out_r.shape
    assert bool(jnp.allclose(out_r, ref_r)), "ragged-H mismatch"

    print("KERNEL_OK")
</pallas_src>

<mosaic_0001>
module attributes {stable_mosaic.version = 11 : i64} {
  func.func @_remove_color_kernel(%arg0: i32, %arg1: i32, %arg2: memref<1x3x16x128xf32, #tpu.memory_space<vmem>>, %arg3: memref<1x3x8x128xf32, #tpu.memory_space<vmem>>, %arg4: memref<1x9x16x16xf32, #tpu.memory_space<vmem>>, %arg5: memref<3x24x128xf32, #tpu.memory_space<vmem>>) attributes {dimension_semantics = [#tpu.dimension_semantics<parallel>, #tpu.dimension_semantics<parallel>], iteration_bounds = array<i64: 2, 1>, scalar_prefetch = 0 : i64, scratch_operands = 1 : i64, tpu.core_type = #tpu.core_type<tc>, window_params = [{transform_indices = @transform_0, window_bounds = array<i64: 1, 3, 16, 128>}, {transform_indices = @transform_1, window_bounds = array<i64: 1, 3, 8, 128>}, {transform_indices = @transform_2, window_bounds = array<i64: 1, 9, 16, 16>}]} {
    %c0 = arith.constant 0 : index
    %c0_0 = arith.constant 0 : index
    %c0_1 = arith.constant 0 : index
    %c0_2 = arith.constant 0 : index
    %0 = vector.load %arg2[%c0, %c0_0, %c0_1, %c0_2] : memref<1x3x16x128xf32, #tpu.memory_space<vmem>>, vector<1x1x16x128xf32>
    %1 = vector.shape_cast %0 : vector<1x1x16x128xf32> to vector<16x128xf32>
    %c0_3 = arith.constant 0 : index
    %c0_4 = arith.constant 0 : index
    %c0_5 = arith.constant 0 : index
    %2 = vector.load %arg5[%c0_3, %c0_4, %c0_5] : memref<3x24x128xf32, #tpu.memory_space<vmem>>, vector<1x16x128xf32>
    %3 = vector.shape_cast %2 : vector<1x16x128xf32> to vector<16x128xf32>
    %4 = vector.shape_cast %1 : vector<16x128xf32> to vector<1x16x128xf32>
    tpu.vector_store %arg5[%c0_3, %c0_4, %c0_5], %4 {strides = array<i32>} : memref<3x24x128xf32, #tpu.memory_space<vmem>>, vector<1x16x128xf32>,
    %c0_6 = arith.constant 0 : index
    %c0_7 = arith.constant 0 : index
    %c0_8 = arith.constant 0 : index
    %c0_9 = arith.constant 0 : index
    %5 = vector.load %arg3[%c0_6, %c0_7, %c0_8, %c0_9] : memref<1x3x8x128xf32, #tpu.memory_space<vmem>>, vector<1x1x8x128xf32>
    %6 = vector.shape_cast %5 : vector<1x1x8x128xf32> to vector<8x128xf32>
    %c0_10 = arith.constant 0 : index
    %c16 = arith.constant 16 : index
    %c0_11 = arith.constant 0 : index
    %7 = vector.load %arg5[%c0_10, %c16, %c0_11] : memref<3x24x128xf32, #tpu.memory_space<vmem>>, vector<1x8x128xf32>
    %8 = vector.shape_cast %7 : vector<1x8x128xf32> to vector<8x128xf32>
    %9 = vector.shape_cast %6 : vector<8x128xf32> to vector<1x8x128xf32>
    tpu.vector_store %arg5[%c0_10, %c16, %c0_11], %9 {strides = array<i32>} : memref<3x24x128xf32, #tpu.memory_space<vmem>>, vector<1x8x128xf32>,
    %c0_12 = arith.constant 0 : index
    %c1 = arith.constant 1 : index
    %c0_13 = arith.constant 0 : index
    %c0_14 = arith.constant 0 : index
    %10 = vector.load %arg2[%c0_12, %c1, %c0_13, %c0_14] : memref<1x3x16x128xf32, #tpu.memory_space<vmem>>, vector<1x1x16x128xf32>
    %11 = vector.shape_cast %10 : vector<1x1x16x128xf32> to vector<16x128xf32>
    %c1_15 = arith.constant 1 : index
    %c0_16 = arith.constant 0 : index
    %c0_17 = arith.constant 0 : index
    %12 = vector.load %arg5[%c1_15, %c0_16, %c0_17] : memref<3x24x128xf32, #tpu.memory_space<vmem>>, vector<1x16x128xf32>
    %13 = vector.shape_cast %12 : vector<1x16x128xf32> to vector<16x128xf32>
    %14 = vector.shape_cast %11 : vector<16x128xf32> to vector<1x16x128xf32>
    tpu.vector_store %arg5[%c1_15, %c0_16, %c0_17], %14 {strides = array<i32>} : memref<3x24x128xf32, #tpu.memory_space<vmem>>, vector<1x16x128xf32>,
    %c0_18 = arith.constant 0 : index
    %c1_19 = arith.constant 1 : index
    %c0_20 = arith.constant 0 : index
    %c0_21 = arith.constant 0 : index
    %15 = vector.load %arg3[%c0_18, %c1_19, %c0_20, %c0_21] : memref<1x3x8x128xf32, #tpu.memory_space<vmem>>, vector<1x1x8x128xf32>
    %16 = vector.shape_cast %15 : vector<1x1x8x128xf32> to vector<8x128xf32>
    %c1_22 = arith.constant 1 : index
    %c16_23 = arith.constant 16 : index
    %c0_24 = arith.constant 0 : index
    %17 = vector.load %arg5[%c1_22, %c16_23, %c0_24] : memref<3x24x128xf32, #tpu.memory_space<vmem>>, vector<1x8x128xf32>
    %18 = vector.shape_cast %17 : vector<1x8x128xf32> to vector<8x128xf32>
    %19 = vector.shape_cast %16 : vector<8x128xf32> to vector<1x8x128xf32>
    tpu.vector_store %arg5[%c1_22, %c16_23, %c0_24], %19 {strides = array<i32>} : memref<3x24x128xf32, #tpu.memory_space<vmem>>, vector<1x8x128xf32>,
    %c0_25 = arith.constant 0 : index
    %c2 = arith.constant 2 : index
    %c0_26 = arith.constant 0 : index
    %c0_27 = arith.constant 0 : index
    %20 = vector.load %arg2[%c0_25, %c2, %c0_26, %c0_27] : memref<1x3x16x128xf32, #tpu.memory_space<vmem>>, vector<1x1x16x128xf32>
    %21 = vector.shape_cast %20 : vector<1x1x16x128xf32> to vector<16x128xf32>
    %c2_28 = arith.constant 2 : index
    %c0_29 = arith.constant 0 : index
    %c0_30 = arith.constant 0 : index
    %22 = vector.load %arg5[%c2_28, %c0_29, %c0_30] : memref<3x24x128xf32, #tpu.memory_space<vmem>>, vector<1x16x128xf32>
    %23 = vector.shape_cast %22 : vector<1x16x128xf32> to vector<16x128xf32>
    %24 = vector.shape_cast %21 : vector<16x128xf32> to vector<1x16x128xf32>
    tpu.vector_store %arg5[%c2_28, %c0_29, %c0_30], %24 {strides = array<i32>} : memref<3x24x128xf32, #tpu.memory_space<vmem>>, vector<1x16x128xf32>,
    %c0_31 = arith.constant 0 : index
    %c2_32 = arith.constant 2 : index
    %c0_33 = arith.constant 0 : index
    %c0_34 = arith.constant 0 : index
    %25 = vector.load %arg3[%c0_31, %c2_32, %c0_33, %c0_34] : memref<1x3x8x128xf32, #tpu.memory_space<vmem>>, vector<1x1x8x128xf32>
    %26 = vector.shape_cast %25 : vector<1x1x8x128xf32> to vector<8x128xf32>
    %c2_35 = arith.constant 2 : index
    %c16_36 = arith.constant 16 : index
    %c0_37 = arith.constant 0 : index
    %27 = vector.load %arg5[%c2_35, %c16_36, %c0_37] : memref<3x24x128xf32, #tpu.memory_space<vmem>>, vector<1x8x128xf32>
    %28 = vector.shape_cast %27 : vector<1x8x128xf32> to vector<8x128xf32>
    %29 = vector.shape_cast %26 : vector<8x128xf32> to vector<1x8x128xf32>
    tpu.vector_store %arg5[%c2_35, %c16_36, %c0_37], %29 {strides = array<i32>} : memref<3x24x128xf32, #tpu.memory_space<vmem>>, vector<1x8x128xf32>,
    %c0_38 = arith.constant 0 : index
    %c1_39 = arith.constant 1 : index
    %c0_40 = arith.constant 0 : index
    %30 = vector.load %arg5[%c0_38, %c1_39, %c0_40] : memref<3x24x128xf32, #tpu.memory_space<vmem>>, vector<1x16x128xf32>
    %31 = vector.shape_cast %30 : vector<1x16x128xf32> to vector<16x128xf32>
    %c0_41 = arith.constant 0 : index
    %c0_42 = arith.constant 0 : index
    %c0_43 = arith.constant 0 : index
    %32 = vector.load %arg5[%c0_41, %c0_42, %c0_43] : memref<3x24x128xf32, #tpu.memory_space<vmem>>, vector<1x16x128xf32>
    %33 = vector.shape_cast %32 : vector<1x16x128xf32> to vector<16x128xf32>
    %c1_i32 = arith.constant 1 : i32
    %34 = tpu.dynamic_rotate %33 by %c1_i32 dim 1 : vector<16x128xf32>, i32 -> vector<16x128xf32>
    %35 = arith.subf %31, %34 : vector<16x128xf32>
    %36 = math.absf %35 : vector<16x128xf32>
    %c1_44 = arith.constant 1 : index
    %c1_45 = arith.constant 1 : index
    %c0_46 = arith.constant 0 : index
    %37 = vector.load %arg5[%c1_44, %c1_45, %c0_46] : memref<3x24x128xf32, #tpu.memory_space<vmem>>, vector<1x16x128xf32>
    %38 = vector.shape_cast %37 : vector<1x16x128xf32> to vector<16x128xf32>
    %c1_47 = arith.constant 1 : index
    %c0_48 = arith.constant 0 : index
    %c0_49 = arith.constant 0 : index
    %39 = vector.load %arg5[%c1_47, %c0_48, %c0_49] : memref<3x24x128xf32, #tpu.memory_space<vmem>>, vector<1x16x128xf32>
    %40 = vector.shape_cast %39 : vector<1x16x128xf32> to vector<16x128xf32>
    %c1_i32_50 = arith.constant 1 : i32
    %41 = tpu.dynamic_rotate %40 by %c1_i32_50 dim 1 : vector<16x128xf32>, i32 -> vector<16x128xf32>
    %42 = arith.subf %38, %41 : vector<16x128xf32>
    %43 = math.absf %42 : vector<16x128xf32>
    %44 = arith.addf %36, %43 : vector<16x128xf32>
    %c2_51 = arith.constant 2 : index
    %c1_52 = arith.constant 1 : index
    %c0_53 = arith.constant 0 : index
    %45 = vector.load %arg5[%c2_51, %c1_52, %c0_53] : memref<3x24x128xf32, #tpu.memory_space<vmem>>, vector<1x16x128xf32>
    %46 = vector.shape_cast %45 : vector<1x16x128xf32> to vector<16x128xf32>
    %c2_54 = arith.constant 2 : index
    %c0_55 = arith.constant 0 : index
    %c0_56 = arith.constant 0 : index
    %47 = vector.load %arg5[%c2_54, %c0_55, %c0_56] : memref<3x24x128xf32, #tpu.memory_space<vmem>>, vector<1x16x128xf32>
    %48 = vector.shape_cast %47 : vector<1x16x128xf32> to vector<16x128xf32>
    %c1_i32_57 = arith.constant 1 : i32
    %49 = tpu.dynamic_rotate %48 by %c1_i32_57 dim 1 : vector<16x128xf32>, i32 -> vector<16x128xf32>
    %50 = arith.subf %46, %49 : vector<16x128xf32>
    %51 = math.absf %50 : vector<16x128xf32>
    %52 = arith.addf %44, %51 : vector<16x128xf32>
    %53 = arith.cmpf one, %52, %52 : vector<16x128xf32>
    %cst = arith.constant 0x7F800000 : f32
    %54 = vector.broadcast %cst : f32 to vector<16x128xf32>
    %55 = arith.select %53, %54, %52 : vector<16x128xi1>, vector<16x128xf32>
    %56 = vector.extract_strided_slice %55 {offsets = [0, 0], sizes = [16, 16], strides = [1, 1]} : vector<16x128xf32> to vector<16x16xf32>
    %c0_58 = arith.constant 0 : index
    %c0_59 = arith.constant 0 : index
    %c0_60 = arith.constant 0 : index
    %c0_61 = arith.constant 0 : index
    %57 = vector.load %arg4[%c0_58, %c0_59, %c0_60, %c0_61] : memref<1x9x16x16xf32, #tpu.memory_space<vmem>>, vector<1x1x16x16xf32>
    %58 = vector.shape_cast %57 : vector<1x1x16x16xf32> to vector<16x16xf32>
    %59 = vector.shape_cast %56 : vector<16x16xf32> to vector<1x1x16x16xf32>
    tpu.vector_store %arg4[%c0_58, %c0_59, %c0_60, %c0_61], %59 {strides = array<i32>} : memref<1x9x16x16xf32, #tpu.memory_space<vmem>>, vector<1x1x16x16xf32>,
    %c0_62 = arith.constant 0 : index
    %c1_63 = arith.constant 1 : index
    %c0_64 = arith.constant 0 : index
    %60 = vector.load %arg5[%c0_62, %c1_63, %c0_64] : memref<3x24x128xf32, #tpu.memory_space<vmem>>, vector<1x16x128xf32>
    %61 = vector.shape_cast %60 : vector<1x16x128xf32> to vector<16x128xf32>
    %c0_65 = arith.constant 0 : index
    %c0_66 = arith.constant 0 : index
    %c0_67 = arith.constant 0 : index
    %62 = vector.load %arg5[%c0_65, %c0_66, %c0_67] : memref<3x24x128xf32, #tpu.memory_space<vmem>>, vector<1x16x128xf32>
    %63 = vector.shape_cast %62 : vector<1x16x128xf32> to vector<16x128xf32>
    %64 = arith.subf %61, %63 : vector<16x128xf32>
    %65 = math.absf %64 : vector<16x128xf32>
    %c1_68 = arith.constant 1 : index
    %c1_69 = arith.constant 1 : index
    %c0_70 = arith.constant 0 : index
    %66 = vector.load %arg5[%c1_68, %c1_69, %c0_70] : memref<3x24x128xf32, #tpu.memory_space<vmem>>, vector<1x16x128xf32>
    %67 = vector.shape_cast %66 : vector<1x16x128xf32> to vector<16x128xf32>
    %c1_71 = arith.constant 1 : index
    %c0_72 = arith.constant 0 : index
    %c0_73 = arith.constant 0 : index
    %68 = vector.load %arg5[%c1_71, %c0_72, %c0_73] : memref<3x24x128xf32, #tpu.memory_space<vmem>>, vector<1x16x128xf32>
    %69 = vector.shape_cast %68 : vector<1x16x128xf32> to vector<16x128xf32>
    %70 = arith.subf %67, %69 : vector<16x128xf32>
    %71 = math.absf %70 : vector<16x128xf32>
    %72 = arith.addf %65, %71 : vector<16x128xf32>
    %c2_74 = arith.constant 2 : index
    %c1_75 = arith.constant 1 : index
    %c0_76 = arith.constant 0 : index
    %73 = vector.load %arg5[%c2_74, %c1_75, %c0_76] : memref<3x24x128xf32, #tpu.memory_space<vmem>>, vector<1x16x128xf32>
    %74 = vector.shape_cast %73 : vector<1x16x128xf32> to vector<16x128xf32>
    %c2_77 = arith.constant 2 : index
    %c0_78 = arith.constant 0 : index
    %c0_79 = arith.constant 0 : index
    %75 = vector.load %arg5[%c2_77, %c0_78, %c0_79] : memref<3x24x128xf32, #tpu.memory_space<vmem>>, vector<1x16x128xf32>
    %76 = vector.shape_cast %75 : vector<1x16x128xf32> to vector<16x128xf32>
    %77 = arith.subf %74, %76 : vector<16x128xf32>
    %78 = math.absf %77 : vector<16x128xf32>
    %79 = arith.addf %72, %78 : vector<16x128xf32>
    %80 = arith.cmpf one, %79, %79 : vector<16x128xf32>
    %cst_80 = arith.constant 0x7F800000 : f32
    %81 = vector.broadcast %cst_80 : f32 to vector<16x128xf32>
    %82 = arith.select %80, %81, %79 : vector<16x128xi1>, vector<16x128xf32>
    %83 = vector.extract_strided_slice %82 {offsets = [0, 0], sizes = [16, 16], strides = [1, 1]} : vector<16x128xf32> to vector<16x16xf32>
    %c0_81 = arith.constant 0 : index
    %c1_82 = arith.constant 1 : index
    %c0_83 = arith.constant 0 : index
    %c0_84 = arith.constant 0 : index
    %84 = vector.load %arg4[%c0_81, %c1_82, %c0_83, %c0_84] : memref<1x9x16x16xf32, #tpu.memory_space<vmem>>, vector<1x1x16x16xf32>
    %85 = vector.shape_cast %84 : vector<1x1x16x16xf32> to vector<16x16xf32>
    %86 = vector.shape_cast %83 : vector<16x16xf32> to vector<1x1x16x16xf32>
    tpu.vector_store %arg4[%c0_81, %c1_82, %c0_83, %c0_84], %86 {strides = array<i32>} : memref<1x9x16x16xf32, #tpu.memory_space<vmem>>, vector<1x1x16x16xf32>,
    %c0_85 = arith.constant 0 : index
    %c1_86 = arith.constant 1 : index
    %c0_87 = arith.constant 0 : index
    %87 = vector.load %arg5[%c0_85, %c1_86, %c0_87] : memref<3x24x128xf32, #tpu.memory_space<vmem>>, vector<1x16x128xf32>
    %88 = vector.shape_cast %87 : vector<1x16x128xf32> to vector<16x128xf32>
    %c0_88 = arith.constant 0 : index
    %c0_89 = arith.constant 0 : index
    %c0_90 = arith.constant 0 : index
    %89 = vector.load %arg5[%c0_88, %c0_89, %c0_90] : memref<3x24x128xf32, #tpu.memory_space<vmem>>, vector<1x16x128xf32>
    %90 = vector.shape_cast %89 : vector<1x16x128xf32> to vector<16x128xf32>
    %c127_i32 = arith.constant 127 : i32
    %91 = tpu.dynamic_rotate %90 by %c127_i32 dim 1 : vector<16x128xf32>, i32 -> vector<16x128xf32>
    %92 = arith.subf %88, %91 : vector<16x128xf32>
    %93 = math.absf %92 : vector<16x128xf32>
    %c1_91 = arith.constant 1 : index
    %c1_92 = arith.constant 1 : index
    %c0_93 = arith.constant 0 : index
    %94 = vector.load %arg5[%c1_91, %c1_92, %c0_93] : memref<3x24x128xf32, #tpu.memory_space<vmem>>, vector<1x16x128xf32>
    %95 = vector.shape_cast %94 : vector<1x16x128xf32> to vector<16x128xf32>
    %c1_94 = arith.constant 1 : index
    %c0_95 = arith.constant 0 : index
    %c0_96 = arith.constant 0 : index
    %96 = vector.load %arg5[%c1_94, %c0_95, %c0_96] : memref<3x24x128xf32, #tpu.memory_space<vmem>>, vector<1x16x128xf32>
    %97 = vector.shape_cast %96 : vector<1x16x128xf32> to vector<16x128xf32>
    %c127_i32_97 = arith.constant 127 : i32
    %98 = tpu.dynamic_rotate %97 by %c127_i32_97 dim 1 : vector<16x128xf32>, i32 -> vector<16x128xf32>
    %99 = arith.subf %95, %98 : vector<16x128xf32>
    %100 = math.absf %99 : vector<16x128xf32>
    %101 = arith.addf %93, %100 : vector<16x128xf32>
    %c2_98 = arith.constant 2 : index
    %c1_99 = arith.constant 1 : index
    %c0_100 = arith.constant 0 : index
    %102 = vector.load %arg5[%c2_98, %c1_99, %c0_100] : memref<3x24x128xf32, #tpu.memory_space<vmem>>, vector<1x16x128xf32>
    %103 = vector.shape_cast %102 : vector<1x16x128xf32> to vector<16x128xf32>
    %c2_101 = arith.constant 2 : index
    %c0_102 = arith.constant 0 : index
    %c0_103 = arith.constant 0 : index
    %104 = vector.load %arg5[%c2_101, %c0_102, %c0_103] : memref<3x24x128xf32, #tpu.memory_space<vmem>>, vector<1x16x128xf32>
    %105 = vector.shape_cast %104 : vector<1x16x128xf32> to vector<16x128xf32>
    %c127_i32_104 = arith.constant 127 : i32
    %106 = tpu.dynamic_rotate %105 by %c127_i32_104 dim 1 : vector<16x128xf32>, i32 -> vector<16x128xf32>
    %107 = arith.subf %103, %106 : vector<16x128xf32>
    %108 = math.absf %107 : vector<16x128xf32>
    %109 = arith.addf %101, %108 : vector<16x128xf32>
    %110 = arith.cmpf one, %109, %109 : vector<16x128xf32>
    %cst_105 = arith.constant 0x7F800000 : f32
    %111 = vector.broadcast %cst_105 : f32 to vector<16x128xf32>
    %112 = arith.select %110, %111, %109 : vector<16x128xi1>, vector<16x128xf32>
    %113 = vector.extract_strided_slice %112 {offsets = [0, 0], sizes = [16, 16], strides = [1, 1]} : vector<16x128xf32> to vector<16x16xf32>
    %c0_106 = arith.constant 0 : index
    %c2_107 = arith.constant 2 : index
    %c0_108 = arith.constant 0 : index
    %c0_109 = arith.constant 0 : index
    %114 = vector.load %arg4[%c0_106, %c2_107, %c0_108, %c0_109] : memref<1x9x16x16xf32, #tpu.memory_space<vmem>>, vector<1x1x16x16xf32>
    %115 = vector.shape_cast %114 : vector<1x1x16x16xf32> to vector<16x16xf32>
    %116 = vector.shape_cast %113 : vector<16x16xf32> to vector<1x1x16x16xf32>
    tpu.vector_store %arg4[%c0_106, %c2_107, %c0_108, %c0_109], %116 {strides = array<i32>} : memref<1x9x16x16xf32, #tpu.memory_space<vmem>>, vector<1x1x16x16xf32>,
    %c0_110 = arith.constant 0 : index
    %c1_111 = arith.constant 1 : index
    %c0_112 = arith.constant 0 : index
    %117 = vector.load %arg5[%c0_110, %c1_111, %c0_112] : memref<3x24x128xf32, #tpu.memory_space<vmem>>, vector<1x16x128xf32>
    %118 = vector.shape_cast %117 : vector<1x16x128xf32> to vector<16x128xf32>
    %c0_113 = arith.constant 0 : index
    %c1_114 = arith.constant 1 : index
    %c0_115 = arith.constant 0 : index
    %119 = vector.load %arg5[%c0_113, %c1_114, %c0_115] : memref<3x24x128xf32, #tpu.memory_space<vmem>>, vector<1x16x128xf32>
    %120 = vector.shape_cast %119 : vector<1x16x128xf32> to vector<16x128xf32>
    %c1_i32_116 = arith.constant 1 : i32
    %121 = tpu.dynamic_rotate %120 by %c1_i32_116 dim 1 : vector<16x128xf32>, i32 -> vector<16x128xf32>
    %122 = arith.subf %118, %121 : vector<16x128xf32>
    %123 = math.absf %122 : vector<16x128xf32>
    %c1_117 = arith.constant 1 : index
    %c1_118 = arith.constant 1 : index
    %c0_119 = arith.constant 0 : index
    %124 = vector.load %arg5[%c1_117, %c1_118, %c0_119] : memref<3x24x128xf32, #tpu.memory_space<vmem>>, vector<1x16x128xf32>
    %125 = vector.shape_cast %124 : vector<1x16x128xf32> to vector<16x128xf32>
    %c1_120 = arith.constant 1 : index
    %c1_121 = arith.constant 1 : index
    %c0_122 = arith.constant 0 : index
    %126 = vector.load %arg5[%c1_120, %c1_121, %c0_122] : memref<3x24x128xf32, #tpu.memory_space<vmem>>, vector<1x16x128xf32>
    %127 = vector.shape_cast %126 : vector<1x16x128xf32> to vector<16x128xf32>
    %c1_i32_123 = arith.constant 1 : i32
    %128 = tpu.dynamic_rotate %127 by %c1_i32_123 dim 1 : vector<16x128xf32>, i32 -> vector<16x128xf32>
    %129 = arith.subf %125, %128 : vector<16x128xf32>
    %130 = math.absf %129 : vector<16x128xf32>
    %131 = arith.addf %123, %130 : vector<16x128xf32>
    %c2_124 = arith.constant 2 : index
    %c1_125 = arith.constant 1 : index
    %c0_126 = arith.constant 0 : index
    %132 = vector.load %arg5[%c2_124, %c1_125, %c0_126] : memref<3x24x128xf32, #tpu.memory_space<vmem>>, vector<1x16x128xf32>
    %133 = vector.shape_cast %132 : vector<1x16x128xf32> to vector<16x128xf32>
    %c2_127 = arith.constant 2 : index
    %c1_128 = arith.constant 1 : index
    %c0_129 = arith.constant 0 : index
    %134 = vector.load %arg5[%c2_127, %c1_128, %c0_129] : memref<3x24x128xf32, #tpu.memory_space<vmem>>, vector<1x16x128xf32>
    %135 = vector.shape_cast %134 : vector<1x16x128xf32> to vector<16x128xf32>
    %c1_i32_130 = arith.constant 1 : i32
    %136 = tpu.dynamic_rotate %135 by %c1_i32_130 dim 1 : vector<16x128xf32>, i32 -> vector<16x128xf32>
    %137 = arith.subf %133, %136 : vector<16x128xf32>
    %138 = math.absf %137 : vector<16x128xf32>
    %139 = arith.addf %131, %138 : vector<16x128xf32>
    %140 = arith.cmpf one, %139, %139 : vector<16x128xf32>
    %cst_131 = arith.constant 0x7F800000 : f32
    %141 = vector.broadcast %cst_131 : f32 to vector<16x128xf32>
    %142 = arith.select %140, %141, %139 : vector<16x128xi1>, vector<16x128xf32>
    %143 = vector.extract_strided_slice %142 {offsets = [0, 0], sizes = [16, 16], strides = [1, 1]} : vector<16x128xf32> to vector<16x16xf32>
    %c0_132 = arith.constant 0 : index
    %c3 = arith.constant 3 : index
    %c0_133 = arith.constant 0 : index
    %c0_134 = arith.constant 0 : index
    %144 = vector.load %arg4[%c0_132, %c3, %c0_133, %c0_134] : memref<1x9x16x16xf32, #tpu.memory_space<vmem>>, vector<1x1x16x16xf32>
    %145 = vector.shape_cast %144 : vector<1x1x16x16xf32> to vector<16x16xf32>
    %146 = vector.shape_cast %143 : vector<16x16xf32> to vector<1x1x16x16xf32>
    tpu.vector_store %arg4[%c0_132, %c3, %c0_133, %c0_134], %146 {strides = array<i32>} : memref<1x9x16x16xf32, #tpu.memory_space<vmem>>, vector<1x1x16x16xf32>,
    %c0_135 = arith.constant 0 : index
    %c1_136 = arith.constant 1 : index
    %c0_137 = arith.constant 0 : index
    %147 = vector.load %arg5[%c0_135, %c1_136, %c0_137] : memref<3x24x128xf32, #tpu.memory_space<vmem>>, vector<1x16x128xf32>
    %148 = vector.shape_cast %147 : vector<1x16x128xf32> to vector<16x128xf32>
    %c0_138 = arith.constant 0 : index
    %c1_139 = arith.constant 1 : index
    %c0_140 = arith.constant 0 : index
    %149 = vector.load %arg5[%c0_138, %c1_139, %c0_140] : memref<3x24x128xf32, #tpu.memory_space<vmem>>, vector<1x16x128xf32>
    %150 = vector.shape_cast %149 : vector<1x16x128xf32> to vector<16x128xf32>
    %151 = arith.subf %148, %150 : vector<16x128xf32>
    %152 = math.absf %151 : vector<16x128xf32>
    %c1_141 = arith.constant 1 : index
    %c1_142 = arith.constant 1 : index
    %c0_143 = arith.constant 0 : index
    %153 = vector.load %arg5[%c1_141, %c1_142, %c0_143] : memref<3x24x128xf32, #tpu.memory_space<vmem>>, vector<1x16x128xf32>
    %154 = vector.shape_cast %153 : vector<1x16x128xf32> to vector<16x128xf32>
    %c1_144 = arith.constant 1 : index
    %c1_145 = arith.constant 1 : index
    %c0_146 = arith.constant 0 : index
    %155 = vector.load %arg5[%c1_144, %c1_145, %c0_146] : memref<3x24x128xf32, #tpu.memory_space<vmem>>, vector<1x16x128xf32>
    %156 = vector.shape_cast %155 : vector<1x16x128xf32> to vector<16x128xf32>
    %157 = arith.subf %154, %156 : vector<16x128xf32>
    %158 = math.absf %157 : vector<16x128xf32>
    %159 = arith.addf %152, %158 : vector<16x128xf32>
    %c2_147 = arith.constant 2 : index
    %c1_148 = arith.constant 1 : index
    %c0_149 = arith.constant 0 : index
    %160 = vector.load %arg5[%c2_147, %c1_148, %c0_149] : memref<3x24x128xf32, #tpu.memory_space<vmem>>, vector<1x16x128xf32>
    %161 = vector.shape_cast %160 : vector<1x16x128xf32> to vector<16x128xf32>
    %c2_150 = arith.constant 2 : index
    %c1_151 = arith.constant 1 : index
    %c0_152 = arith.constant 0 : index
    %162 = vector.load %arg5[%c2_150, %c1_151, %c0_152] : memref<3x24x128xf32, #tpu.memory_space<vmem>>, vector<1x16x128xf32>
    %163 = vector.shape_cast %162 : vector<1x16x128xf32> to vector<16x128xf32>
    %164 = arith.subf %161, %163 : vector<16x128xf32>
    %165 = math.absf %164 : vector<16x128xf32>
    %166 = arith.addf %159, %165 : vector<16x128xf32>
    %167 = arith.cmpf one, %166, %166 : vector<16x128xf32>
    %cst_153 = arith.constant 0x7F800000 : f32
    %168 = vector.broadcast %cst_153 : f32 to vector<16x128xf32>
    %169 = arith.select %167, %168, %166 : vector<16x128xi1>, vector<16x128xf32>
    %170 = vector.extract_strided_slice %169 {offsets = [0, 0], sizes = [16, 16], strides = [1, 1]} : vector<16x128xf32> to vector<16x16xf32>
    %c0_154 = arith.constant 0 : index
    %c4 = arith.constant 4 : index
    %c0_155 = arith.constant 0 : index
    %c0_156 = arith.constant 0 : index
    %171 = vector.load %arg4[%c0_154, %c4, %c0_155, %c0_156] : memref<1x9x16x16xf32, #tpu.memory_space<vmem>>, vector<1x1x16x16xf32>
    %172 = vector.shape_cast %171 : vector<1x1x16x16xf32> to vector<16x16xf32>
    %173 = vector.shape_cast %170 : vector<16x16xf32> to vector<1x1x16x16xf32>
    tpu.vector_store %arg4[%c0_154, %c4, %c0_155, %c0_156], %173 {strides = array<i32>} : memref<1x9x16x16xf32, #tpu.memory_space<vmem>>, vector<1x1x16x16xf32>,
    %c0_157 = arith.constant 0 : index
    %c1_158 = arith.constant 1 : index
    %c0_159 = arith.constant 0 : index
    %174 = vector.load %arg5[%c0_157, %c1_158, %c0_159] : memref<3x24x128xf32, #tpu.memory_space<vmem>>, vector<1x16x128xf32>
    %175 = vector.shape_cast %174 : vector<1x16x128xf32> to vector<16x128xf32>
    %c0_160 = arith.constant 0 : index
    %c1_161 = arith.constant 1 : index
    %c0_162 = arith.constant 0 : index
    %176 = vector.load %arg5[%c0_160, %c1_161, %c0_162] : memref<3x24x128xf32, #tpu.memory_space<vmem>>, vector<1x16x128xf32>
    %177 = vector.shape_cast %176 : vector<1x16x128xf32> to vector<16x128xf32>
    %c127_i32_163 = arith.constant 127 : i32
    %178 = tpu.dynamic_rotate %177 by %c127_i32_163 dim 1 : vector<16x128xf32>, i32 -> vector<16x128xf32>
    %179 = arith.subf %175, %178 : vector<16x128xf32>
    %180 = math.absf %179 : vector<16x128xf32>
    %c1_164 = arith.constant 1 : index
    %c1_165 = arith.constant 1 : index
    %c0_166 = arith.constant 0 : index
    %181 = vector.load %arg5[%c1_164, %c1_165, %c0_166] : memref<3x24x128xf32, #tpu.memory_space<vmem>>, vector<1x16x128xf32>
    %182 = vector.shape_cast %181 : vector<1x16x128xf32> to vector<16x128xf32>
    %c1_167 = arith.constant 1 : index
    %c1_168 = arith.constant 1 : index
    %c0_169 = arith.constant 0 : index
    %183 = vector.load %arg5[%c1_167, %c1_168, %c0_169] : memref<3x24x128xf32, #tpu.memory_space<vmem>>, vector<1x16x128xf32>
    %184 = vector.shape_cast %183 : vector<1x16x128xf32> to vector<16x128xf32>
    %c127_i32_170 = arith.constant 127 : i32
    %185 = tpu.dynamic_rotate %184 by %c127_i32_170 dim 1 : vector<16x128xf32>, i32 -> vector<16x128xf32>
    %186 = arith.subf %182, %185 : vector<16x128xf32>
    %187 = math.absf %186 : vector<16x128xf32>
    %188 = arith.addf %180, %187 : vector<16x128xf32>
    %c2_171 = arith.constant 2 : index
    %c1_172 = arith.constant 1 : index
    %c0_173 = arith.constant 0 : index
    %189 = vector.load %arg5[%c2_171, %c1_172, %c0_173] : memref<3x24x128xf32, #tpu.memory_space<vmem>>, vector<1x16x128xf32>
    %190 = vector.shape_cast %189 : vector<1x16x128xf32> to vector<16x128xf32>
    %c2_174 = arith.constant 2 : index
    %c1_175 = arith.constant 1 : index
    %c0_176 = arith.constant 0 : index
    %191 = vector.load %arg5[%c2_174, %c1_175, %c0_176] : memref<3x24x128xf32, #tpu.memory_space<vmem>>, vector<1x16x128xf32>
    %192 = vector.shape_cast %191 : vector<1x16x128xf32> to vector<16x128xf32>
    %c127_i32_177 = arith.constant 127 : i32
    %193 = tpu.dynamic_rotate %192 by %c127_i32_177 dim 1 : vector<16x128xf32>, i32 -> vector<16x128xf32>
    %194 = arith.subf %190, %193 : vector<16x128xf32>
    %195 = math.absf %194 : vector<16x128xf32>
    %196 = arith.addf %188, %195 : vector<16x128xf32>
    %197 = arith.cmpf one, %196, %196 : vector<16x128xf32>
    %cst_178 = arith.constant 0x7F800000 : f32
    %198 = vector.broadcast %cst_178 : f32 to vector<16x128xf32>
    %199 = arith.select %197, %198, %196 : vector<16x128xi1>, vector<16x128xf32>
    %200 = vector.extract_strided_slice %199 {offsets = [0, 0], sizes = [16, 16], strides = [1, 1]} : vector<16x128xf32> to vector<16x16xf32>
    %c0_179 = arith.constant 0 : index
    %c5 = arith.constant 5 : index
    %c0_180 = arith.constant 0 : index
    %c0_181 = arith.constant 0 : index
    %201 = vector.load %arg4[%c0_179, %c5, %c0_180, %c0_181] : memref<1x9x16x16xf32, #tpu.memory_space<vmem>>, vector<1x1x16x16xf32>
    %202 = vector.shape_cast %201 : vector<1x1x16x16xf32> to vector<16x16xf32>
    %203 = vector.shape_cast %200 : vector<16x16xf32> to vector<1x1x16x16xf32>
    tpu.vector_store %arg4[%c0_179, %c5, %c0_180, %c0_181], %203 {strides = array<i32>} : memref<1x9x16x16xf32, #tpu.memory_space<vmem>>, vector<1x1x16x16xf32>,
    %c0_182 = arith.constant 0 : index
    %c1_183 = arith.constant 1 : index
    %c0_184 = arith.constant 0 : index
    %204 = vector.load %arg5[%c0_182, %c1_183, %c0_184] : memref<3x24x128xf32, #tpu.memory_space<vmem>>, vector<1x16x128xf32>
    %205 = vector.shape_cast %204 : vector<1x16x128xf32> to vector<16x128xf32>
    %c0_185 = arith.constant 0 : index
    %c2_186 = arith.constant 2 : index
    %c0_187 = arith.constant 0 : index
    %206 = vector.load %arg5[%c0_185, %c2_186, %c0_187] : memref<3x24x128xf32, #tpu.memory_space<vmem>>, vector<1x16x128xf32>
    %207 = vector.shape_cast %206 : vector<1x16x128xf32> to vector<16x128xf32>
    %c1_i32_188 = arith.constant 1 : i32
    %208 = tpu.dynamic_rotate %207 by %c1_i32_188 dim 1 : vector<16x128xf32>, i32 -> vector<16x128xf32>
    %209 = arith.subf %205, %208 : vector<16x128xf32>
    %210 = math.absf %209 : vector<16x128xf32>
    %c1_189 = arith.constant 1 : index
    %c1_190 = arith.constant 1 : index
    %c0_191 = arith.constant 0 : index
    %211 = vector.load %arg5[%c1_189, %c1_190, %c0_191] : memref<3x24x128xf32, #tpu.memory_space<vmem>>, vector<1x16x128xf32>
    %212 = vector.shape_cast %211 : vector<1x16x128xf32> to vector<16x128xf32>
    %c1_192 = arith.constant 1 : index
    %c2_193 = arith.constant 2 : index
    %c0_194 = arith.constant 0 : index
    %213 = vector.load %arg5[%c1_192, %c2_193, %c0_194] : memref<3x24x128xf32, #tpu.memory_space<vmem>>, vector<1x16x128xf32>
    %214 = vector.shape_cast %213 : vector<1x16x128xf32> to vector<16x128xf32>
    %c1_i32_195 = arith.constant 1 : i32
    %215 = tpu.dynamic_rotate %214 by %c1_i32_195 dim 1 : vector<16x128xf32>, i32 -> vector<16x128xf32>
    %216 = arith.subf %212, %215 : vector<16x128xf32>
    %217 = math.absf %216 : vector<16x128xf32>
    %218 = arith.addf %210, %217 : vector<16x128xf32>
    %c2_196 = arith.constant 2 : index
    %c1_197 = arith.constant 1 : index
    %c0_198 = arith.constant 0 : index
    %219 = vector.load %arg5[%c2_196, %c1_197, %c0_198] : memref<3x24x128xf32, #tpu.memory_space<vmem>>, vector<1x16x128xf32>
    %220 = vector.shape_cast %219 : vector<1x16x128xf32> to vector<16x128xf32>
    %c2_199 = arith.constant 2 : index
    %c2_200 = arith.constant 2 : index
    %c0_201 = arith.constant 0 : index
    %221 = vector.load %arg5[%c2_199, %c2_200, %c0_201] : memref<3x24x128xf32, #tpu.memory_space<vmem>>, vector<1x16x128xf32>
    %222 = vector.shape_cast %221 : vector<1x16x128xf32> to vector<16x128xf32>
    %c1_i32_202 = arith.constant 1 : i32
    %223 = tpu.dynamic_rotate %222 by %c1_i32_202 dim 1 : vector<16x128xf32>, i32 -> vector<16x128xf32>
    %224 = arith.subf %220, %223 : vector<16x128xf32>
    %225 = math.absf %224 : vector<16x128xf32>
    %226 = arith.addf %218, %225 : vector<16x128xf32>
    %227 = arith.cmpf one, %226, %226 : vector<16x128xf32>
    %cst_203 = arith.constant 0x7F800000 : f32
    %228 = vector.broadcast %cst_203 : f32 to vector<16x128xf32>
    %229 = arith.select %227, %228, %226 : vector<16x128xi1>, vector<16x128xf32>
    %230 = vector.extract_strided_slice %229 {offsets = [0, 0], sizes = [16, 16], strides = [1, 1]} : vector<16x128xf32> to vector<16x16xf32>
    %c0_204 = arith.constant 0 : index
    %c6 = arith.constant 6 : index
    %c0_205 = arith.constant 0 : index
    %c0_206 = arith.constant 0 : index
    %231 = vector.load %arg4[%c0_204, %c6, %c0_205, %c0_206] : memref<1x9x16x16xf32, #tpu.memory_space<vmem>>, vector<1x1x16x16xf32>
    %232 = vector.shape_cast %231 : vector<1x1x16x16xf32> to vector<16x16xf32>
    %233 = vector.shape_cast %230 : vector<16x16xf32> to vector<1x1x16x16xf32>
    tpu.vector_store %arg4[%c0_204, %c6, %c0_205, %c0_206], %233 {strides = array<i32>} : memref<1x9x16x16xf32, #tpu.memory_space<vmem>>, vector<1x1x16x16xf32>,
    %c0_207 = arith.constant 0 : index
    %c1_208 = arith.constant 1 : index
    %c0_209 = arith.constant 0 : index
    %234 = vector.load %arg5[%c0_207, %c1_208, %c0_209] : memref<3x24x128xf32, #tpu.memory_space<vmem>>, vector<1x16x128xf32>
    %235 = vector.shape_cast %234 : vector<1x16x128xf32> to vector<16x128xf32>
    %c0_210 = arith.constant 0 : index
    %c2_211 = arith.constant 2 : index
    %c0_212 = arith.constant 0 : index
    %236 = vector.load %arg5[%c0_210, %c2_211, %c0_212] : memref<3x24x128xf32, #tpu.memory_space<vmem>>, vector<1x16x128xf32>
    %237 = vector.shape_cast %236 : vector<1x16x128xf32> to vector<16x128xf32>
    %238 = arith.subf %235, %237 : vector<16x128xf32>
    %239 = math.absf %238 : vector<16x128xf32>
    %c1_213 = arith.constant 1 : index
    %c1_214 = arith.constant 1 : index
    %c0_215 = arith.constant 0 : index
    %240 = vector.load %arg5[%c1_213, %c1_214, %c0_215] : memref<3x24x128xf32, #tpu.memory_space<vmem>>, vector<1x16x128xf32>
    %241 = vector.shape_cast %240 : vector<1x16x128xf32> to vector<16x128xf32>
    %c1_216 = arith.constant 1 : index
    %c2_217 = arith.constant 2 : index
    %c0_218 = arith.constant 0 : index
    %242 = vector.load %arg5[%c1_216, %c2_217, %c0_218] : memref<3x24x128xf32, #tpu.memory_space<vmem>>, vector<1x16x128xf32>
    %243 = vector.shape_cast %242 : vector<1x16x128xf32> to vector<16x128xf32>
    %244 = arith.subf %241, %243 : vector<16x128xf32>
    %245 = math.absf %244 : vector<16x128xf32>
    %246 = arith.addf %239, %245 : vector<16x128xf32>
    %c2_219 = arith.constant 2 : index
    %c1_220 = arith.constant 1 : index
    %c0_221 = arith.constant 0 : index
    %247 = vector.load %arg5[%c2_219, %c1_220, %c0_221] : memref<3x24x128xf32, #tpu.memory_space<vmem>>, vector<1x16x128xf32>
    %248 = vector.shape_cast %247 : vector<1x16x128xf32> to vector<16x128xf32>
    %c2_222 = arith.constant 2 : index
    %c2_223 = arith.constant 2 : index
    %c0_224 = arith.constant 0 : index
    %249 = vector.load %arg5[%c2_222, %c2_223, %c0_224] : memref<3x24x128xf32, #tpu.memory_space<vmem>>, vector<1x16x128xf32>
    %250 = vector.shape_cast %249 : vector<1x16x128xf32> to vector<16x128xf32>
    %251 = arith.subf %248, %250 : vector<16x128xf32>
    %252 = math.absf %251 : vector<16x128xf32>
    %253 = arith.addf %246, %252 : vector<16x128xf32>
    %254 = arith.cmpf one, %253, %253 : vector<16x128xf32>
    %cst_225 = arith.constant 0x7F800000 : f32
    %255 = vector.broadcast %cst_225 : f32 to vector<16x128xf32>
    %256 = arith.select %254, %255, %253 : vector<16x128xi1>, vector<16x128xf32>
    %257 = vector.extract_strided_slice %256 {offsets = [0, 0], sizes = [16, 16], strides = [1, 1]} : vector<16x128xf32> to vector<16x16xf32>
    %c0_226 = arith.constant 0 : index
    %c7 = arith.constant 7 : index
    %c0_227 = arith.constant 0 : index
    %c0_228 = arith.constant 0 : index
    %258 = vector.load %arg4[%c0_226, %c7, %c0_227, %c0_228] : memref<1x9x16x16xf32, #tpu.memory_space<vmem>>, vector<1x1x16x16xf32>
    %259 = vector.shape_cast %258 : vector<1x1x16x16xf32> to vector<16x16xf32>
    %260 = vector.shape_cast %257 : vector<16x16xf32> to vector<1x1x16x16xf32>
    tpu.vector_store %arg4[%c0_226, %c7, %c0_227, %c0_228], %260 {strides = array<i32>} : memref<1x9x16x16xf32, #tpu.memory_space<vmem>>, vector<1x1x16x16xf32>,
    %c0_229 = arith.constant 0 : index
    %c1_230 = arith.constant 1 : index
    %c0_231 = arith.constant 0 : index
    %261 = vector.load %arg5[%c0_229, %c1_230, %c0_231] : memref<3x24x128xf32, #tpu.memory_space<vmem>>, vector<1x16x128xf32>
    %262 = vector.shape_cast %261 : vector<1x16x128xf32> to vector<16x128xf32>
    %c0_232 = arith.constant 0 : index
    %c2_233 = arith.constant 2 : index
    %c0_234 = arith.constant 0 : index
    %263 = vector.load %arg5[%c0_232, %c2_233, %c0_234] : memref<3x24x128xf32, #tpu.memory_space<vmem>>, vector<1x16x128xf32>
    %264 = vector.shape_cast %263 : vector<1x16x128xf32> to vector<16x128xf32>
    %c127_i32_235 = arith.constant 127 : i32
    %265 = tpu.dynamic_rotate %264 by %c127_i32_235 dim 1 : vector<16x128xf32>, i32 -> vector<16x128xf32>
    %266 = arith.subf %262, %265 : vector<16x128xf32>
    %267 = math.absf %266 : vector<16x128xf32>
    %c1_236 = arith.constant 1 : index
    %c1_237 = arith.constant 1 : index
    %c0_238 = arith.constant 0 : index
    %268 = vector.load %arg5[%c1_236, %c1_237, %c0_238] : memref<3x24x128xf32, #tpu.memory_space<vmem>>, vector<1x16x128xf32>
    %269 = vector.shape_cast %268 : vector<1x16x128xf32> to vector<16x128xf32>
    %c1_239 = arith.constant 1 : index
    %c2_240 = arith.constant 2 : index
    %c0_241 = arith.constant 0 : index
    %270 = vector.load %arg5[%c1_239, %c2_240, %c0_241] : memref<3x24x128xf32, #tpu.memory_space<vmem>>, vector<1x16x128xf32>
    %271 = vector.shape_cast %270 : vector<1x16x128xf32> to vector<16x128xf32>
    %c127_i32_242 = arith.constant 127 : i32
    %272 = tpu.dynamic_rotate %271 by %c127_i32_242 dim 1 : vector<16x128xf32>, i32 -> vector<16x128xf32>
    %273 = arith.subf %269, %272 : vector<16x128xf32>
    %274 = math.absf %273 : vector<16x128xf32>
    %275 = arith.addf %267, %274 : vector<16x128xf32>
    %c2_243 = arith.constant 2 : index
    %c1_244 = arith.constant 1 : index
    %c0_245 = arith.constant 0 : index
    %276 = vector.load %arg5[%c2_243, %c1_244, %c0_245] : memref<3x24x128xf32, #tpu.memory_space<vmem>>, vector<1x16x128xf32>
    %277 = vector.shape_cast %276 : vector<1x16x128xf32> to vector<16x128xf32>
    %c2_246 = arith.constant 2 : index
    %c2_247 = arith.constant 2 : index
    %c0_248 = arith.constant 0 : index
    %278 = vector.load %arg5[%c2_246, %c2_247, %c0_248] : memref<3x24x128xf32, #tpu.memory_space<vmem>>, vector<1x16x128xf32>
    %279 = vector.shape_cast %278 : vector<1x16x128xf32> to vector<16x128xf32>
    %c127_i32_249 = arith.constant 127 : i32
    %280 = tpu.dynamic_rotate %279 by %c127_i32_249 dim 1 : vector<16x128xf32>, i32 -> vector<16x128xf32>
    %281 = arith.subf %277, %280 : vector<16x128xf32>
    %282 = math.absf %281 : vector<16x128xf32>
    %283 = arith.addf %275, %282 : vector<16x128xf32>
    %284 = arith.cmpf one, %283, %283 : vector<16x128xf32>
    %cst_250 = arith.constant 0x7F800000 : f32
    %285 = vector.broadcast %cst_250 : f32 to vector<16x128xf32>
    %286 = arith.select %284, %285, %283 : vector<16x128xi1>, vector<16x128xf32>
    %287 = vector.extract_strided_slice %286 {offsets = [0, 0], sizes = [16, 16], strides = [1, 1]} : vector<16x128xf32> to vector<16x16xf32>
    %c0_251 = arith.constant 0 : index
    %c8 = arith.constant 8 : index
    %c0_252 = arith.constant 0 : index
    %c0_253 = arith.constant 0 : index
    %288 = vector.load %arg4[%c0_251, %c8, %c0_252, %c0_253] : memref<1x9x16x16xf32, #tpu.memory_space<vmem>>, vector<1x1x16x16xf32>
    %289 = vector.shape_cast %288 : vector<1x1x16x16xf32> to vector<16x16xf32>
    %290 = vector.shape_cast %287 : vector<16x16xf32> to vector<1x1x16x16xf32>
    tpu.vector_store %arg4[%c0_251, %c8, %c0_252, %c0_253], %290 {strides = array<i32>} : memref<1x9x16x16xf32, #tpu.memory_space<vmem>>, vector<1x1x16x16xf32>,
    return
  }
  func.func @transform_0(%arg0: i32, %arg1: i32) -> (i32, i32, i32, i32) {
    %c0_i32 = arith.constant 0 : i32
    %c0_i32_0 = arith.constant 0 : i32
    %c0_i32_1 = arith.constant 0 : i32
    return %arg0, %c0_i32, %arg1, %c0_i32_0 : i32, i32, i32, i32
  }
  func.func @transform_1(%arg0: i32, %arg1: i32) -> (i32, i32, i32, i32) {
    %c1_i32 = arith.constant 1 : i32
    %0 = arith.addi %arg1, %c1_i32 : i32
    %c2_i32 = arith.constant 2 : i32
    %1 = arith.muli %0, %c2_i32 : i32
    %c0_i32 = arith.constant 0 : i32
    %c0_i32_0 = arith.constant 0 : i32
    %c0_i32_1 = arith.constant 0 : i32
    return %arg0, %c0_i32, %1, %c0_i32_0 : i32, i32, i32, i32
  }
  func.func @transform_2(%arg0: i32, %arg1: i32) -> (i32, i32, i32, i32) {
    %c0_i32 = arith.constant 0 : i32
    %c0_i32_0 = arith.constant 0 : i32
    %c0_i32_1 = arith.constant 0 : i32
    return %arg0, %c0_i32, %arg1, %c0_i32_0 : i32, i32, i32, i32
  }
}

</mosaic_0001>

<llo_original>
// kernel: tpu_custom_call.1
$region0: #{tpu_custom_call.1}
  #allocation0 [shape = 'u32[]', space=smem, size = 0x4, offset = 0x4, fixed_abs, tag = 'smem constant byte address 0x4 - core index']
  #allocation1 [shape = 'u32[144,128]{1,0:T(1,128)}', space=vmem, size = 0x12000, scoped, tag = 'internal scratch']
  #allocation2 [shape = 'f32[3,24,128]{2,1,0:T(8,128)}', space=vmem, size = 0x9000, scoped, tag = 'scratch operand']
  #allocation9 [shape = 's32[]', space=sflag, size = 0x4, offset = 0, fixed_abs, tag = 'sflag constant byte address 0x0 - dummy sync flag']
  %s0 = inlined_call_operand.hbm [shape: f32[2,3,24,128], index: 0, kind: input, shape index: {}]
  %s1 = inlined_call_operand.hbm [shape: f32[2,3,24,128], index: 1, kind: input, shape index: {}]
  %s2 = inlined_call_operand.hbm [shape: f32[2,9,16,16], index: 2, kind: output, shape index: {}]
  %s3 = sld [smem:[#allocation0]]
  $region49: #{tpu_custom_call.1} parent=0
    _
  %s5 = ssub.s32 1, %s3
  %s6 = scalar_select 0, %s5, %s3
  $region1: #{tpu_custom_call.1} parent=0
    #allocation3 [shape = 'u8[49152]{0}', space=vmem, size = 0xc000, scoped, tag = 'input window, operand 0']
    #allocation4 [shape = 's32[2]{0}', space=sflag, size = 0x8, scoped, tag = 'scoped memory for tpu_custom_call.1']
    #allocation5 [shape = 's32[2]{0}', space=sflag, size = 0x8, scoped, tag = 'scoped memory for tpu_custom_call.1']
    #allocation6 [shape = 'u8[24576]{0}', space=vmem, size = 0x6000, scoped, tag = 'input window, operand 1']
    #allocation7 [shape = 's32[2]{0}', space=sflag, size = 0x8, scoped, tag = 'scoped memory for tpu_custom_call.1']
    #allocation8 [shape = 'u8[147456]{0}', space=vmem, size = 0x24000, scoped, tag = 'output window, operand 0']
    %7 = vsyncpa [#allocation4], 0
    %s8 = scalar_lea.sflag [#allocation4], 1
    %9 = vsyncpa %s8, 0
    %10 = vsyncpa [#allocation7], 0
    %s11 = scalar_lea.sflag [#allocation7], 1
    %12 = vsyncpa %s11, 0
    %13 = vsyncpa [#allocation5], 0
    %s14 = scalar_lea.sflag [#allocation5], 1
    %15 = vsyncpa %s14, 0
    loop: start=0, step=1, limit=4
    $region2: #{tpu_custom_call.1} parent=1 // loop_pre_header
      _
    $region3: #{tpu_custom_call.1} parent=1 // loop_header
      %s17 = sphi 0, %s21
      %p18 = scmp.ge.s32.totalorder %s17, 4
      %s24 = sphi 0, %s36
      %s25 = sphi 0, %s32
      %s26 = sphi 0, %s24
      %s27 = sphi 0, %s25
      %s28 = sphi 0, %s26
      %s29 = sphi 0, %s27
      %s41 = sphi 0, %s43
      %s44 = sphi 0, %s41
      %s45 = sphi 0, %s44
      %s61 = sphi 0, %s45
      %s73 = sphi 0, %s75
      %s76 = sphi 0, %s73
      %s77 = sphi 0, %s76
      %s93 = sphi 0, %s77
      %s101 = sphi 0, %s103
      %s104 = sphi 0, %s101
      %s105 = sphi 0, %s104
      %s121 = sphi 0, %s105
    $region4: #{tpu_custom_call.1} parent=1 // loop_header_branch
      %20 = sbr.rel (%p18) target = $region8
    $region5: #{tpu_custom_call.1} parent=1 // loop_body
      %s22 = ssub.s32 %s17, 1
      %s23 = ssub.s32 %s17, 2
      %s30 = sadd.s32 1, %s25
      %p31 = scmp.ge.s32.totalorder %s30, 1
      %s32 = scalar_select %p31, 0, %s30
      %s33 = sadd.s32 1, %s24
      %s34 = scalar_select %p31, %s33, %s24
      %p35 = scmp.ge.s32.totalorder %s34, 2
      %s36 = scalar_select %p35, 0, %s34
      %s37 = ssub.s32 %s24, %s36
      %s38 = ssub.s32 %s25, %s32
      %s39 = sor.u32 %s37, %s38
      %p40 = scmp.eq.s32.totalorder %s39, 0
      %s42 = sadd.s32 %s41, 1
      %s43 = scalar_select %p40, %s41, %s42
      %p46 = pneg %p40
      %p47 = scmp.eq.s32.totalorder %s17, 1
      %p48 = por %p46, %p47
      %p49 = scmp.ne.s32.totalorder %s41, %s44
      %p50 = scmp.eq.s32.totalorder %s17, 0
      %p51 = por %p49, %p50
      %p52 = scmp.ne.s32.totalorder %s41, %s44
      %p53 = scmp.eq.s32.totalorder %s22, 1
      %p54 = por %p52, %p53
      %p55 = scmp.ne.s32.totalorder %s44, %s45
      %p56 = scmp.eq.s32.totalorder %s22, 0
      %p57 = por %p55, %p56
      %p58 = scmp.ne.s32.totalorder %s44, %s45
      %p59 = scmp.eq.s32.totalorder %s23, 1
      %p60 = por %p58, %p59
      %p62 = scmp.ne.s32.totalorder %s45, %s61
      %p63 = scmp.eq.s32.totalorder %s23, 0
      %p64 = por %p62, %p63
      %s65 = sadd.s32 %s25, 1
      %s66 = smul.u32 %s65, 2
      %s67 = sadd.s32 %s32, 1
      %s68 = smul.u32 %s67, 2
      %s69 = ssub.s32 %s24, %s36
      %s70 = ssub.s32 %s66, %s68
      %s71 = sor.u32 %s69, %s70
      %p72 = scmp.eq.s32.totalorder %s71, 0
      %s74 = sadd.s32 %s73, 1
      %s75 = scalar_select %p72, %s73, %s74
      %p78 = pneg %p72
      %p79 = scmp.eq.s32.totalorder %s17, 1
      %p80 = por %p78, %p79
      %p81 = scmp.ne.s32.totalorder %s73, %s76
      %p82 = scmp.eq.s32.totalorder %s17, 0
      %p83 = por %p81, %p82
      %p84 = scmp.ne.s32.totalorder %s73, %s76
      %p85 = scmp.eq.s32.totalorder %s22, 1
      %p86 = por %p84, %p85
      %p87 = scmp.ne.s32.totalorder %s76, %s77
      %p88 = scmp.eq.s32.totalorder %s22, 0
      %p89 = por %p87, %p88
      %p90 = scmp.ne.s32.totalorder %s76, %s77
      %p91 = scmp.eq.s32.totalorder %s23, 1
      %p92 = por %p90, %p91
      %p94 = scmp.ne.s32.totalorder %s77, %s93
      %p95 = scmp.eq.s32.totalorder %s23, 0
      %p96 = por %p94, %p95
      %s97 = ssub.s32 %s24, %s36
      %s98 = ssub.s32 %s25, %s32
      %s99 = sor.u32 %s97, %s98
      %p100 = scmp.eq.s32.totalorder %s99, 0
      %s102 = sadd.s32 %s101, 1
      %s103 = scalar_select %p100, %s101, %s102
      %p106 = pneg %p100
      %p107 = scmp.eq.s32.totalorder %s17, 1
      %p108 = por %p106, %p107
      %p109 = scmp.ne.s32.totalorder %s101, %s104
      %p110 = scmp.eq.s32.totalorder %s17, 0
      %p111 = por %p109, %p110
      %p112 = scmp.ne.s32.totalorder %s101, %s104
      %p113 = scmp.eq.s32.totalorder %s22, 1
      %p114 = por %p112, %p113
      %p115 = scmp.ne.s32.totalorder %s104, %s105
      %p116 = scmp.eq.s32.totalorder %s22, 0
      %p117 = por %p115, %p116
      %p118 = scmp.ne.s32.totalorder %s104, %s105
      %p119 = scmp.eq.s32.totalorder %s23, 1
      %p120 = por %p118, %p119
      %p122 = scmp.ne.s32.totalorder %s105, %s121
      %p123 = scmp.eq.s32.totalorder %s23, 0
      %p124 = por %p122, %p123
      %p125 = scmp.le.s32.totalorder 1, %s17
      %p126 = scmp.lt.s32.totalorder %s17, 3
      %p127 = pnand %p125, %p126
      %p128 = pneg %p127
      // Predicated region
      $region9: #{tpu_custom_call.1} parent=5 // pred_check
        _
      $region10: #{tpu_custom_call.1} parent=5 // pred_check_branch
        %130 = sbr.rel (%p127) target = $region12
      $region11: #{tpu_custom_call.1} parent=5 // pred_region
        %s131 = ssub.s32 %s17, 1
      $region12: #{tpu_custom_call.1} parent=5 // pred_fallthru
        _
      %p132 = scmp.lt.s32.totalorder %s17, 2
      // Predicated region
      $region13: #{tpu_custom_call.1} parent=5 // pred_check
        %p133 = pneg %p132
      $region14: #{tpu_custom_call.1} parent=5 // pred_check_branch
        %135 = sbr.rel (%p133) target = $region16
      $region15: #{tpu_custom_call.1} parent=5 // pred_region
        // Predicated region
        $region17: #{tpu_custom_call.1} parent=15 // pred_check
          %p136 = pneg %p51
        $region18: #{tpu_custom_call.1} parent=15 // pred_check_branch
          %138 = sbr.rel (%p136) target = $region20
        $region19: #{tpu_custom_call.1} parent=15 // pred_region
          #allocation10 [shape = 'u32[6]{0}', space=smem, size = 0x18, scoped, tag = 'DMA stride descriptor']
          %s139 = sand.u32 %s41, 1
          %s140 = scalar_lea.sflag [#allocation4], %s139
          %s141 = sand.u32 %s41, 1
          %s142 = smul.addr %s141, 48
          %s143 = scalar_lea.vmem [#allocation3], %s142
          %s144 = smul.u32 2, %s25
          %s145 = ssub.s32 3, %s144
          %p146 = scmp.lt.s32.totalorder %s145, 2
          %s147 = scalar_select %p146, %s145, 2
          %s148 = smul.u32 384, %s147
          %s150 = ssub.s32 768, %s148
          %151 = vsyncadd %s140, %s150
          %p152 = scmp.ne.s32.totalorder 0, %s148
          %s153 = smul.addr %s24, 9
          %s154 = sadd.s32 %s144, %s153
          %s155 = smul.addr %s154, 128
          %s156 = scalar_lea.hbm %s0, %s155
          %s157 = smul.u32 8, %s147
          %s158 = smul.u32 %s157, 3
          %s160 = sshll.u32 1, 14
          %s161 = sxor.u32 4294967295, %s160
          %s163 = sld [smem:[#allocation0]]
          %s164 = sadd.s32 2, %s163
          %s166 = sshll.u32 7, 26
          %s167 = sxor.u32 4294967295, %s166
          %s168 = sand.u32 0, %s167
          %s169 = sshll.u32 %s164, 26
          %s170 = sor.u32 %s168, %s169
          %s171 = sshll.u32 %s143, 4
          %s172 = int_to_ptr.vmem [resolvable:$true] %s171
          %s173 = sshll.u32 %s158, 4
          %178 = sst [smem:[#allocation10]] 384
          %s179 = scalar_lea.smem [#allocation10], 1
          %180 = sst [smem:[%s179]] 256
          %s181 = scalar_lea.smem [#allocation10], 2
          %182 = sst [smem:[%s181]] %s147
          %s183 = scalar_lea.smem [#allocation10], 3
          %184 = sst [smem:[%s183]] 128
          %s185 = scalar_lea.smem [#allocation10], 4
          %186 = sst [smem:[%s185]] 128
          %s187 = scalar_lea.smem [#allocation10], 5
          %188 = sst [smem:[%s187]] 8
          %190 = dma.general (%p152), %s156, %s173, %s172, %s140, 131072, [#allocation10], %s170, 0
        $region20: #{tpu_custom_call.1} parent=15 // pred_fallthru
          _
        // Predicated region
        $region21: #{tpu_custom_call.1} parent=15 // pred_check
          %p191 = pneg %p83
        $region22: #{tpu_custom_call.1} parent=15 // pred_check_branch
          %193 = sbr.rel (%p191) target = $region24
        $region23: #{tpu_custom_call.1} parent=15 // pred_region
          %s194 = sand.u32 %s73, 1
          %s195 = scalar_lea.sflag [#allocation7], %s194
          %s196 = sand.u32 %s73, 1
          %s197 = smul.addr %s196, 24
          %s198 = scalar_lea.vmem [#allocation6], %s197
          %s199 = sadd.s32 %s25, 1
          %s200 = smul.u32 %s199, 2
          %s202 = ssub.s32 384, 384
          %203 = vsyncadd %s195, %s202
          %s204 = smul.addr %s24, 9
          %s205 = sadd.s32 %s200, %s204
          %s206 = smul.addr %s205, 128
          %s207 = scalar_lea.hbm %s1, %s206
          %s208 = sshll.u32 %s198, 4
          %s209 = int_to_ptr.vmem [resolvable:$true] %s208
          %214 = dma.hbm_to_vmem [thread:$0]  %s207, 384, %s209, %s195, 384, 128, 8
        $region24: #{tpu_custom_call.1} parent=15 // pred_fallthru
          _
      $region16: #{tpu_custom_call.1} parent=5 // pred_fallthru
        _
      %p215 = scmp.le.s32.totalorder 1, %s17
      %p216 = scmp.lt.s32.totalorder %s17, 3
      %p217 = pnand %p215, %p216
      %p218 = pneg %p217
      // Predicated region
      $region25: #{tpu_custom_call.1} parent=5 // pred_check
        _
      $region26: #{tpu_custom_call.1} parent=5 // pred_check_branch
        %220 = sbr.rel (%p217) target = $region28
      $region27: #{tpu_custom_call.1} parent=5 // pred_region
        %s221 = ssub.s32 %s17, 1
        %s222 = sand.u32 %s44, 1
        %s223 = scalar_lea.sflag [#allocation4], %s222
        %s224 = sand.u32 %s44, 1
        %s225 = smul.addr %s224, 48
        %s226 = scalar_lea.vmem [#allocation3], %s225
        // Predicated region
        $region29: #{tpu_custom_call.1} parent=27 // pred_check
          %p227 = pneg %p57
        $region30: #{tpu_custom_call.1} parent=27 // pred_check_branch
          %229 = sbr.rel (%p227) target = $region32
        $region31: #{tpu_custom_call.1} parent=27 // pred_region
          %230 = dma.done %s223, 768
        $region32: #{tpu_custom_call.1} parent=27 // pred_fallthru
          _
        %s231 = sand.u32 %s76, 1
        %s232 = scalar_lea.sflag [#allocation7], %s231
        %s233 = sand.u32 %s76, 1
        %s234 = smul.addr %s233, 24
        %s235 = scalar_lea.vmem [#allocation6], %s234
        // Predicated region
        $region33: #{tpu_custom_call.1} parent=27 // pred_check
          %p236 = pneg %p89
        $region34: #{tpu_custom_call.1} parent=27 // pred_check_branch
          %238 = sbr.rel (%p236) target = $region36
        $region35: #{tpu_custom_call.1} parent=27 // pred_region
          %239 = dma.done %s232, 384
        $region36: #{tpu_custom_call.1} parent=27 // pred_fallthru
          _
        %s240 = sand.u32 %s44, 1
        %s241 = scalar_lea.sflag [#allocation4], %s240
        %s242 = sand.u32 %s44, 1
        %s243 = smul.addr %s242, 48
        %s244 = scalar_lea.vmem [#allocation3], %s243
        %p245 = pneg %p57
        %p246 = pneg %p54
        %s247 = sand.u32 %s76, 1
        %s248 = scalar_lea.sflag [#allocation7], %s247
        %s249 = sand.u32 %s76, 1
        %s250 = smul.addr %s249, 24
        %s251 = scalar_lea.vmem [#allocation6], %s250
        %p252 = pneg %p89
        %p253 = pneg %p86
        %p254 = pneg %p117
        %p255 = pneg %p114
        %s256 = sand.u32 %s104, 1
        %s257 = scalar_lea.sflag [#allocation5], %s256
        %s258 = sand.u32 %s104, 1
        %s259 = smul.addr %s258, 144
        %s260 = scalar_lea.vmem [#allocation8], %s259
        %s261 = smul.u32 2, %s27
        %s262 = ssub.s32 3, %s261
        %p263 = scmp.lt.s32.totalorder %s262, 2
        %s264 = scalar_select %p263, %s262, 2
        %s265 = smul.u32 384, %s264
        %s266 = sadd.s32 %s27, 1
        %s267 = smul.u32 %s266, 2
        %s268 = smul.u32 2, %s27
        %v269 = vld [vmem:[%s226] sm:$0xff]
        %v270 = vld [vmem:[%s226 + $0x8] sm:$0xff]
        %271 = vst [vmem:[#allocation2] sm:$0xff] %v269
        %272 = vst [vmem:[#allocation2 + $0x8] sm:$0xff] %v270
        %v273 = vld [vmem:[%s235] sm:$0xff]
        %274 = vst [vmem:[#allocation2 + $0x10] sm:$0xff] %v273
        %s275 = scalar_lea.vmem %s226, 16 [#allocation3]
        %v276 = vld [vmem:[%s275] sm:$0xff]
        %v277 = vld [vmem:[%s275 + $0x8] sm:$0xff]
        %s278 = scalar_lea.vmem [#allocation2], 24
        %279 = vst [vmem:[%s278] sm:$0xff] %v276
        %280 = vst [vmem:[%s278 + $0x8] sm:$0xff] %v277
        %s281 = scalar_lea.vmem %s235, 8 [#allocation6]
        %v282 = vld [vmem:[%s281] sm:$0xff]
        %283 = vst [vmem:[%s278 + $0x10] sm:$0xff] %v282
        %s284 = scalar_lea.vmem %s226, 32 [#allocation3]
        %v285 = vld [vmem:[%s284] sm:$0xff]
        %v286 = vld [vmem:[%s284 + $0x8] sm:$0xff]
        %s287 = scalar_lea.vmem [#allocation2], 48
        %288 = vst [vmem:[%s287] sm:$0xff] %v285
        %289 = vst [vmem:[%s287 + $0x8] sm:$0xff] %v286
        %s290 = scalar_lea.vmem %s235, 16 [#allocation6]
        %v291 = vld [vmem:[%s290] sm:$0xff]
        %292 = vst [vmem:[%s287 + $0x10] sm:$0xff] %v291
        %v293 = vld [vmem:[#allocation2 + $0x1] sm:$0xff]
        %v294 = vld [vmem:[#allocation2 + $0x9] sm:$0xff]
        %v295 = vld [vmem:[#allocation2] sm:$0xff]
        %v296 = vld [vmem:[#allocation2 + $0x8] sm:$0xff]
        %297 = vrot.lane.b32.xlu0 %v295, 1
        %v298 = vpop.permute.xlu0 %297
        %299 = vrot.lane.b32.xlu0 %v296, 1
        %v300 = vpop.permute.xlu0 %299
        %v301 = vsub.f32 %v293, %v298
        %v302 = vsub.f32 %v294, %v300
        %v303 = vand.u32 2147483647, %v301
        %v304 = vand.u32 2147483647, %v302
        %v305 = vld [vmem:[%s278 + $0x1] sm:$0xff]
        %v306 = vld [vmem:[%s278 + $0x9] sm:$0xff]
        %v307 = vld [vmem:[%s278] sm:$0xff]
        %v308 = vld [vmem:[%s278 + $0x8] sm:$0xff]
        %309 = vrot.lane.b32.xlu0 %v307, 1
        %v310 = vpop.permute.xlu0 %309
        %311 = vrot.lane.b32.xlu0 %v308, 1
        %v312 = vpop.permute.xlu0 %311
        %v313 = vsub.f32 %v305, %v310
        %v314 = vsub.f32 %v306, %v312
        %v315 = vand.u32 2147483647, %v313
        %v316 = vand.u32 2147483647, %v314
        %v317 = vadd.f32 %v303, %v315
        %v318 = vadd.f32 %v304, %v316
        %v319 = vld [vmem:[%s287 + $0x1] sm:$0xff]
        %v320 = vld [vmem:[%s287 + $0x9] sm:$0xff]
        %v321 = vld [vmem:[%s287] sm:$0xff]
        %v322 = vld [vmem:[%s287 + $0x8] sm:$0xff]
        %323 = vrot.lane.b32.xlu0 %v321, 1
        %v324 = vpop.permute.xlu0 %323
        %325 = vrot.lane.b32.xlu0 %v322, 1
        %v326 = vpop.permute.xlu0 %325
        %v327 = vsub.f32 %v319, %v324
        %v328 = vsub.f32 %v320, %v326
        %v329 = vand.u32 2147483647, %v327
        %v330 = vand.u32 2147483647, %v328
        %v331 = vadd.f32 %v317, %v329
        %v332 = vadd.f32 %v318, %v330
        %vm333 = vcmp.ne.f32.partialorder %v331, %v331
        %vm334 = vcmp.ne.f32.partialorder %v332, %v332
        %v335 = vsel %vm333, inf, %v331
        %v336 = vsel %vm334, inf, %v332
        %vm337 = vcmask 130048
        %338 = vst.msk [vmem:[%s260] sm:$0xff] %vm337, %v335
        %339 = vst.msk [vmem:[%s260 + $0x8] sm:$0xff] %vm337, %v336
        %v340 = vld [vmem:[#allocation2 + $0x1] sm:$0xff]
        %v341 = vld [vmem:[#allocation2 + $0x9] sm:$0xff]
        %v342 = vld [vmem:[#allocation2] sm:$0xff]
        %v343 = vld [vmem:[#allocation2 + $0x8] sm:$0xff]
        %v344 = vsub.f32 %v340, %v342
        %v345 = vsub.f32 %v341, %v343
        %v346 = vand.u32 2147483647, %v344
        %v347 = vand.u32 2147483647, %v345
        %v348 = vld [vmem:[%s278 + $0x1] sm:$0xff]
        %v349 = vld [vmem:[%s278 + $0x9] sm:$0xff]
        %v350 = vld [vmem:[%s278] sm:$0xff]
        %v351 = vld [vmem:[%s278 + $0x8] sm:$0xff]
        %v352 = vsub.f32 %v348, %v350
        %v353 = vsub.f32 %v349, %v351
        %v354 = vand.u32 2147483647, %v352
        %v355 = vand.u32 2147483647, %v353
        %v356 = vadd.f32 %v346, %v354
        %v357 = vadd.f32 %v347, %v355
        %v358 = vld [vmem:[%s287 + $0x1] sm:$0xff]
        %v359 = vld [vmem:[%s287 + $0x9] sm:$0xff]
        %v360 = vld [vmem:[%s287] sm:$0xff]
        %v361 = vld [vmem:[%s287 + $0x8] sm:$0xff]
        %v362 = vsub.f32 %v358, %v360
        %v363 = vsub.f32 %v359, %v361
        %v364 = vand.u32 2147483647, %v362
        %v365 = vand.u32 2147483647, %v363
        %v366 = vadd.f32 %v356, %v364
        %v367 = vadd.f32 %v357, %v365
        %vm368 = vcmp.ne.f32.partialorder %v366, %v366
        %vm369 = vcmp.ne.f32.partialorder %v367, %v367
        %v370 = vsel %vm368, inf, %v366
        %v371 = vsel %vm369, inf, %v367
        %s372 = scalar_lea.vmem %s260, 16 [#allocation8]
        %373 = vst.msk [vmem:[%s372] sm:$0xff] %vm337, %v370
        %374 = vst.msk [vmem:[%s372 + $0x8] sm:$0xff] %vm337, %v371
        %v375 = vld [vmem:[#allocation2 + $0x1] sm:$0xff]
        %v376 = vld [vmem:[#allocation2 + $0x9] sm:$0xff]
        %v377 = vld [vmem:[#allocation2] sm:$0xff]
        %v378 = vld [vmem:[#allocation2 + $0x8] sm:$0xff]
        %379 = vrot.lane.b32.xlu0 %v377, 127
        %v380 = vpop.permute.xlu0 %379
        %381 = vrot.lane.b32.xlu0 %v378, 127
        %v382 = vpop.permute.xlu0 %381
        %v383 = vsub.f32 %v375, %v380
        %v384 = vsub.f32 %v376, %v382
        %v385 = vand.u32 2147483647, %v383
        %v386 = vand.u32 2147483647, %v384
        %v387 = vld [vmem:[%s278 + $0x1] sm:$0xff]
        %v388 = vld [vmem:[%s278 + $0x9] sm:$0xff]
        %v389 = vld [vmem:[%s278] sm:$0xff]
        %v390 = vld [vmem:[%s278 + $0x8] sm:$0xff]
        %391 = vrot.lane.b32.xlu0 %v389, 127
        %v392 = vpop.permute.xlu0 %391
        %393 = vrot.lane.b32.xlu0 %v390, 127
        %v394 = vpop.permute.xlu0 %393
        %v395 = vsub.f32 %v387, %v392
        %v396 = vsub.f32 %v388, %v394
        %v397 = vand.u32 2147483647, %v395
        %v398 = vand.u32 2147483647, %v396
        %v399 = vadd.f32 %v385, %v397
        %v400 = vadd.f32 %v386, %v398
        %v401 = vld [vmem:[%s287 + $0x1] sm:$0xff]
        %v402 = vld [vmem:[%s287 + $0x9] sm:$0xff]
        %v403 = vld [vmem:[%s287] sm:$0xff]
        %v404 = vld [vmem:[%s287 + $0x8] sm:$0xff]
        %405 = vrot.lane.b32.xlu0 %v403, 127
        %v406 = vpop.permute.xlu0 %405
        %407 = vrot.lane.b32.xlu0 %v404, 127
        %v408 = vpop.permute.xlu0 %407
        %v409 = vsub.f32 %v401, %v406
        %v410 = vsub.f32 %v402, %v408
        %v411 = vand.u32 2147483647, %v409
        %v412 = vand.u32 2147483647, %v410
        %v413 = vadd.f32 %v399, %v411
        %v414 = vadd.f32 %v400, %v412
        %vm415 = vcmp.ne.f32.partialorder %v413, %v413
        %vm416 = vcmp.ne.f32.partialorder %v414, %v414
        %v417 = vsel %vm415, inf, %v413
        %v418 = vsel %vm416, inf, %v414
        %s419 = scalar_lea.vmem %s260, 32 [#allocation8]
        %420 = vst.msk [vmem:[%s419] sm:$0xff] %vm337, %v417
        %421 = vst.msk [vmem:[%s419 + $0x8] sm:$0xff] %vm337, %v418
        %v422 = vld [vmem:[#allocation2 + $0x1] sm:$0xff]
        %v423 = vld [vmem:[#allocation2 + $0x9] sm:$0xff]
        %424 = vrot.lane.b32.xlu0 %v422, 1
        %v425 = vpop.permute.xlu0 %424
        %426 = vrot.lane.b32.xlu0 %v423, 1
        %v427 = vpop.permute.xlu0 %426
        %v428 = vsub.f32 %v422, %v425
        %v429 = vsub.f32 %v423, %v427
        %v430 = vand.u32 2147483647, %v428
        %v431 = vand.u32 2147483647, %v429
        %v432 = vld [vmem:[%s278 + $0x1] sm:$0xff]
        %v433 = vld [vmem:[%s278 + $0x9] sm:$0xff]
        %434 = vrot.lane.b32.xlu0 %v432, 1
        %v435 = vpop.permute.xlu0 %434
        %436 = vrot.lane.b32.xlu0 %v433, 1
        %v437 = vpop.permute.xlu0 %436
        %v438 = vsub.f32 %v432, %v435
        %v439 = vsub.f32 %v433, %v437
        %v440 = vand.u32 2147483647, %v438
        %v441 = vand.u32 2147483647, %v439
        %v442 = vadd.f32 %v430, %v440
        %v443 = vadd.f32 %v431, %v441
        %v444 = vld [vmem:[%s287 + $0x1] sm:$0xff]
        %v445 = vld [vmem:[%s287 + $0x9] sm:$0xff]
        %446 = vrot.lane.b32.xlu0 %v444, 1
        %v447 = vpop.permute.xlu0 %446
        %448 = vrot.lane.b32.xlu0 %v445, 1
        %v449 = vpop.permute.xlu0 %448
        %v450 = vsub.f32 %v444, %v447
        %v451 = vsub.f32 %v445, %v449
        %v452 = vand.u32 2147483647, %v450
        %v453 = vand.u32 2147483647, %v451
        %v454 = vadd.f32 %v442, %v452
        %v455 = vadd.f32 %v443, %v453
        %vm456 = vcmp.ne.f32.partialorder %v454, %v454
        %vm457 = vcmp.ne.f32.partialorder %v455, %v455
        %v458 = vsel %vm456, inf, %v454
        %v459 = vsel %vm457, inf, %v455
        %s460 = scalar_lea.vmem %s260, 48 [#allocation8]
        %461 = vst.msk [vmem:[%s460] sm:$0xff] %vm337, %v458
        %462 = vst.msk [vmem:[%s460 + $0x8] sm:$0xff] %vm337, %v459
        %v463 = vld [vmem:[#allocation2 + $0x1] sm:$0xff]
        %v464 = vld [vmem:[#allocation2 + $0x9] sm:$0xff]
        %v465 = vsub.f32 %v463, %v463
        %v466 = vsub.f32 %v464, %v464
        %v467 = vand.u32 2147483647, %v465
        %v468 = vand.u32 2147483647, %v466
        %v469 = vld [vmem:[%s278 + $0x1] sm:$0xff]
        %v470 = vld [vmem:[%s278 + $0x9] sm:$0xff]
        %v471 = vsub.f32 %v469, %v469
        %v472 = vsub.f32 %v470, %v470
        %v473 = vand.u32 2147483647, %v471
        %v474 = vand.u32 2147483647, %v472
        %v475 = vadd.f32 %v467, %v473
        %v476 = vadd.f32 %v468, %v474
        %v477 = vld [vmem:[%s287 + $0x1] sm:$0xff]
        %v478 = vld [vmem:[%s287 + $0x9] sm:$0xff]
        %v479 = vsub.f32 %v477, %v477
        %v480 = vsub.f32 %v478, %v478
        %v481 = vand.u32 2147483647, %v479
        %v482 = vand.u32 2147483647, %v480
        %v483 = vadd.f32 %v475, %v481
        %v484 = vadd.f32 %v476, %v482
        %vm485 = vcmp.ne.f32.partialorder %v483, %v483
        %vm486 = vcmp.ne.f32.partialorder %v484, %v484
        %v487 = vsel %vm485, inf, %v483
        %v488 = vsel %vm486, inf, %v484
        %s489 = scalar_lea.vmem %s260, 64 [#allocation8]
        %490 = vst.msk [vmem:[%s489] sm:$0xff] %vm337, %v487
        %491 = vst.msk [vmem:[%s489 + $0x8] sm:$0xff] %vm337, %v488
        %v492 = vld [vmem:[#allocation2 + $0x1] sm:$0xff]
        %v493 = vld [vmem:[#allocation2 + $0x9] sm:$0xff]
        %494 = vrot.lane.b32.xlu0 %v492, 127
        %v495 = vpop.permute.xlu0 %494
        %496 = vrot.lane.b32.xlu0 %v493, 127
        %v497 = vpop.permute.xlu0 %496
        %v498 = vsub.f32 %v492, %v495
        %v499 = vsub.f32 %v493, %v497
        %v500 = vand.u32 2147483647, %v498
        %v501 = vand.u32 2147483647, %v499
        %v502 = vld [vmem:[%s278 + $0x1] sm:$0xff]
        %v503 = vld [vmem:[%s278 + $0x9] sm:$0xff]
        %504 = vrot.lane.b32.xlu0 %v502, 127
        %v505 = vpop.permute.xlu0 %504
        %506 = vrot.lane.b32.xlu0 %v503, 127
        %v507 = vpop.permute.xlu0 %506
        %v508 = vsub.f32 %v502, %v505
        %v509 = vsub.f32 %v503, %v507
        %v510 = vand.u32 2147483647, %v508
        %v511 = vand.u32 2147483647, %v509
        %v512 = vadd.f32 %v500, %v510
        %v513 = vadd.f32 %v501, %v511
        %v514 = vld [vmem:[%s287 + $0x1] sm:$0xff]
        %v515 = vld [vmem:[%s287 + $0x9] sm:$0xff]
        %516 = vrot.lane.b32.xlu0 %v514, 127
        %v517 = vpop.permute.xlu0 %516
        %518 = vrot.lane.b32.xlu0 %v515, 127
        %v519 = vpop.permute.xlu0 %518
        %v520 = vsub.f32 %v514, %v517
        %v521 = vsub.f32 %v515, %v519
        %v522 = vand.u32 2147483647, %v520
        %v523 = vand.u32 2147483647, %v521
        %v524 = vadd.f32 %v512, %v522
        %v525 = vadd.f32 %v513, %v523
        %vm526 = vcmp.ne.f32.partialorder %v524, %v524
        %vm527 = vcmp.ne.f32.partialorder %v525, %v525
        %v528 = vsel %vm526, inf, %v524
        %v529 = vsel %vm527, inf, %v525
        %s530 = scalar_lea.vmem %s260, 80 [#allocation8]
        %531 = vst.msk [vmem:[%s530] sm:$0xff] %vm337, %v528
        %532 = vst.msk [vmem:[%s530 + $0x8] sm:$0xff] %vm337, %v529
        %v533 = vld [vmem:[#allocation2 + $0x1] sm:$0xff]
        %v534 = vld [vmem:[#allocation2 + $0x9] sm:$0xff]
        %v535 = vld [vmem:[#allocation2 + $0x2] sm:$0xff]
        %v536 = vld [vmem:[#allocation2 + $0xa] sm:$0xff]
        %537 = vrot.lane.b32.xlu0 %v535, 1
        %v538 = vpop.permute.xlu0 %537
        %539 = vrot.lane.b32.xlu0 %v536, 1
        %v540 = vpop.permute.xlu0 %539
        %v541 = vsub.f32 %v533, %v538
        %v542 = vsub.f32 %v534, %v540
        %v543 = vand.u32 2147483647, %v541
        %v544 = vand.u32 2147483647, %v542
        %v545 = vld [vmem:[%s278 + $0x1] sm:$0xff]
        %v546 = vld [vmem:[%s278 + $0x9] sm:$0xff]
        %v547 = vld [vmem:[%s278 + $0x2] sm:$0xff]
        %v548 = vld [vmem:[%s278 + $0xa] sm:$0xff]
        %549 = vrot.lane.b32.xlu0 %v547, 1
        %v550 = vpop.permute.xlu0 %549
        %551 = vrot.lane.b32.xlu0 %v548, 1
        %v552 = vpop.permute.xlu0 %551
        %v553 = vsub.f32 %v545, %v550
        %v554 = vsub.f32 %v546, %v552
        %v555 = vand.u32 2147483647, %v553
        %v556 = vand.u32 2147483647, %v554
        %v557 = vadd.f32 %v543, %v555
        %v558 = vadd.f32 %v544, %v556
        %v559 = vld [vmem:[%s287 + $0x1] sm:$0xff]
        %v560 = vld [vmem:[%s287 + $0x9] sm:$0xff]
        %v561 = vld [vmem:[%s287 + $0x2] sm:$0xff]
        %v562 = vld [vmem:[%s287 + $0xa] sm:$0xff]
        %563 = vrot.lane.b32.xlu0 %v561, 1
        %v564 = vpop.permute.xlu0 %563
        %565 = vrot.lane.b32.xlu0 %v562, 1
        %v566 = vpop.permute.xlu0 %565
        %v567 = vsub.f32 %v559, %v564
        %v568 = vsub.f32 %v560, %v566
        %v569 = vand.u32 2147483647, %v567
        %v570 = vand.u32 2147483647, %v568
        %v571 = vadd.f32 %v557, %v569
        %v572 = vadd.f32 %v558, %v570
        %vm573 = vcmp.ne.f32.partialorder %v571, %v571
        %vm574 = vcmp.ne.f32.partialorder %v572, %v572
        %v575 = vsel %vm573, inf, %v571
        %v576 = vsel %vm574, inf, %v572
        %s577 = scalar_lea.vmem %s260, 96 [#allocation8]
        %578 = vst.msk [vmem:[%s577] sm:$0xff] %vm337, %v575
        %579 = vst.msk [vmem:[%s577 + $0x8] sm:$0xff] %vm337, %v576
        %v580 = vld [vmem:[#allocation2 + $0x1] sm:$0xff]
        %v581 = vld [vmem:[#allocation2 + $0x9] sm:$0xff]
        %v582 = vld [vmem:[#allocation2 + $0x2] sm:$0xff]
        %v583 = vld [vmem:[#allocation2 + $0xa] sm:$0xff]
        %v584 = vsub.f32 %v580, %v582
        %v585 = vsub.f32 %v581, %v583
        %v586 = vand.u32 2147483647, %v584
        %v587 = vand.u32 2147483647, %v585
        %v588 = vld [vmem:[%s278 + $0x1] sm:$0xff]
        %v589 = vld [vmem:[%s278 + $0x9] sm:$0xff]
        %v590 = vld [vmem:[%s278 + $0x2] sm:$0xff]
        %v591 = vld [vmem:[%s278 + $0xa] sm:$0xff]
        %v592 = vsub.f32 %v588, %v590
        %v593 = vsub.f32 %v589, %v591
        %v594 = vand.u32 2147483647, %v592
        %v595 = vand.u32 2147483647, %v593
        %v596 = vadd.f32 %v586, %v594
        %v597 = vadd.f32 %v587, %v595
        %v598 = vld [vmem:[%s287 + $0x1] sm:$0xff]
        %v599 = vld [vmem:[%s287 + $0x9] sm:$0xff]
        %v600 = vld [vmem:[%s287 + $0x2] sm:$0xff]
        %v601 = vld [vmem:[%s287 + $0xa] sm:$0xff]
        %v602 = vsub.f32 %v598, %v600
        %v603 = vsub.f32 %v599, %v601
        %v604 = vand.u32 2147483647, %v602
        %v605 = vand.u32 2147483647, %v603
        %v606 = vadd.f32 %v596, %v604
        %v607 = vadd.f32 %v597, %v605
        %vm608 = vcmp.ne.f32.partialorder %v606, %v606
        %vm609 = vcmp.ne.f32.partialorder %v607, %v607
        %v610 = vsel %vm608, inf, %v606
        %v611 = vsel %vm609, inf, %v607
        %s612 = scalar_lea.vmem %s260, 112 [#allocation8]
        %613 = vst.msk [vmem:[%s612] sm:$0xff] %vm337, %v610
        %614 = vst.msk [vmem:[%s612 + $0x8] sm:$0xff] %vm337, %v611
        %v615 = vld [vmem:[#allocation2 + $0x1] sm:$0xff]
        %v616 = vld [vmem:[#allocation2 + $0x9] sm:$0xff]
        %v617 = vld [vmem:[#allocation2 + $0x2] sm:$0xff]
        %v618 = vld [vmem:[#allocation2 + $0xa] sm:$0xff]
        %619 = vrot.lane.b32.xlu0 %v617, 127
        %v620 = vpop.permute.xlu0 %619
        %621 = vrot.lane.b32.xlu0 %v618, 127
        %v622 = vpop.permute.xlu0 %621
        %v623 = vsub.f32 %v615, %v620
        %v624 = vsub.f32 %v616, %v622
        %v625 = vand.u32 2147483647, %v623
        %v626 = vand.u32 2147483647, %v624
        %v627 = vld [vmem:[%s278 + $0x1] sm:$0xff]
        %v628 = vld [vmem:[%s278 + $0x9] sm:$0xff]
        %v629 = vld [vmem:[%s278 + $0x2] sm:$0xff]
        %v630 = vld [vmem:[%s278 + $0xa] sm:$0xff]
        %631 = vrot.lane.b32.xlu0 %v629, 127
        %v632 = vpop.permute.xlu0 %631
        %633 = vrot.lane.b32.xlu0 %v630, 127
        %v634 = vpop.permute.xlu0 %633
        %v635 = vsub.f32 %v627, %v632
        %v636 = vsub.f32 %v628, %v634
        %v637 = vand.u32 2147483647, %v635
        %v638 = vand.u32 2147483647, %v636
        %v639 = vadd.f32 %v625, %v637
        %v640 = vadd.f32 %v626, %v638
        %v641 = vld [vmem:[%s287 + $0x1] sm:$0xff]
        %v642 = vld [vmem:[%s287 + $0x9] sm:$0xff]
        %v643 = vld [vmem:[%s287 + $0x2] sm:$0xff]
        %v644 = vld [vmem:[%s287 + $0xa] sm:$0xff]
        %645 = vrot.lane.b32.xlu0 %v643, 127
        %v646 = vpop.permute.xlu0 %645
        %647 = vrot.lane.b32.xlu0 %v644, 127
        %v648 = vpop.permute.xlu0 %647
        %v649 = vsub.f32 %v641, %v646
        %v650 = vsub.f32 %v642, %v648
        %v651 = vand.u32 2147483647, %v649
        %v652 = vand.u32 2147483647, %v650
        %v653 = vadd.f32 %v639, %v651
        %v654 = vadd.f32 %v640, %v652
        %vm655 = vcmp.ne.f32.partialorder %v653, %v653
        %vm656 = vcmp.ne.f32.partialorder %v654, %v654
        %v657 = vsel %vm655, inf, %v653
        %v658 = vsel %vm656, inf, %v654
        %s659 = scalar_lea.vmem %s260, 128 [#allocation8]
        %660 = vst.msk [vmem:[%s659] sm:$0xff] %vm337, %v657
        %661 = vst.msk [vmem:[%s659 + $0x8] sm:$0xff] %vm337, %v658
        %s662 = sand.u32 %s104, 1
        %s663 = scalar_lea.sflag [#allocation5], %s662
        %s664 = sand.u32 %s104, 1
        %s665 = smul.addr %s664, 144
        %s666 = scalar_lea.vmem [#allocation8], %s665
        // Predicated region
        $region37: #{tpu_custom_call.1} parent=27 // pred_check
          %p667 = pneg %p114
        $region38: #{tpu_custom_call.1} parent=27 // pred_check_branch
          %669 = sbr.rel (%p667) target = $region40
        $region39: #{tpu_custom_call.1} parent=27 // pred_region
          %s670 = smul.u32 2, %s27
          %s672 = ssub.s32 2304, 2304
          %673 = vsyncadd %s663, %s672
          %s674 = smul.addr %s26, 18
          %s675 = sadd.s32 %s670, %s674
          %s676 = smul.addr %s675, 128
          %s677 = scalar_lea.hbm %s2, %s676
          %s678 = sshll.u32 %s666, 4
          %s679 = int_to_ptr.vmem [resolvable:$true] %s678
          %684 = dma.vmem_to_hbm [thread:$0]  %s679, 2304, %s677, %s663, 128, 128, 8
        $region40: #{tpu_custom_call.1} parent=27 // pred_fallthru
          _
      $region28: #{tpu_custom_call.1} parent=5 // pred_fallthru
        _
      %p685 = scmp.le.s32.totalorder 2, %s17
      // Predicated region
      $region41: #{tpu_custom_call.1} parent=5 // pred_check
        %p686 = pneg %p685
      $region42: #{tpu_custom_call.1} parent=5 // pred_check_branch
        %688 = sbr.rel (%p686) target = $region44
      $region43: #{tpu_custom_call.1} parent=5 // pred_region
        %s689 = ssub.s32 %s17, 2
        // Predicated region
        $region45: #{tpu_custom_call.1} parent=43 // pred_check
          %p690 = pneg %p120
        $region46: #{tpu_custom_call.1} parent=43 // pred_check_branch
          %692 = sbr.rel (%p690) target = $region48
        $region47: #{tpu_custom_call.1} parent=43 // pred_region
          %s693 = sand.u32 %s105, 1
          %s694 = scalar_lea.sflag [#allocation5], %s693
          %s695 = sand.u32 %s105, 1
          %s696 = smul.addr %s695, 144
          %s697 = scalar_lea.vmem [#allocation8], %s696
          %698 = dma.done %s694, 2304
        $region48: #{tpu_custom_call.1} parent=43 // pred_fallthru
          _
      $region44: #{tpu_custom_call.1} parent=5 // pred_fallthru
        _
    $region6: #{tpu_custom_call.1} parent=1 // loop_footer
      %s21 = sadd.s32 1, %s17
    $region7: #{tpu_custom_call.1} parent=1 // loop_footer_branch
      %16 = sbr.rel target = $region3
    $region8: #{tpu_custom_call.1} parent=1 // loop_exit
      _
    %699 = vsyncpa [#allocation4], 1
    %s700 = scalar_lea.sflag [#allocation4], 1
    %701 = vsyncpa %s700, 1
    %702 = vsyncpa [#allocation7], 1
    %s703 = scalar_lea.sflag [#allocation7], 1
    %704 = vsyncpa %s703, 1
    %705 = vsyncpa [#allocation5], 1
    %s706 = scalar_lea.sflag [#allocation5], 1
    %707 = vsyncpa %s706, 1

</llo_original>
